<compile_context>
chip_gen: v5e
topology: v5e:2x2
jax: 0.10.0
libtpu: 0.0.40
codegen_flags: <defaults>
</compile_context>

<pallas_src>
import jax
import jax.numpy as jnp
from jax import lax
from jax.experimental import pallas as pl
from jax.experimental.pallas import tpu as pltpu

# ----------------------------- configuration -----------------------------
WORD_DIM = 32          # word_dim
HIDDEN_DIM = 32        # hidden_dim
VOCAB_LAYER_DIM = 32   # vocab_layer_size (weight_tying=False)
V_DE = 40              # len(DE.vocab)
V_EN = 48              # len(EN.vocab)
BATCH = 2
BP = 8                 # sublane-padded batch (per-step tiles are full (8,128))
T_DE = 8
T_EN = 8
PAD_TOKEN = 1
SOS_TOKEN = 2

H4 = 4 * HIDDEN_DIM    # packed gate width = 128 lanes: [i|f|g|o], 32 lanes each
VP = 128               # padded vocab width (lane-dense one-hots / logits)
NEG = -1e30            # finite "-inf" for padded logits (f32 only!)

_VMEM = pl.BlockSpec(memory_space=pltpu.MemorySpace.VMEM)


# ----------------------------- fused forward kernel -----------------------------
def s2s_fused_kernel(ids_de_ref, ids_en_ref,
                     tbl_de_ref, tbl_en_ref,
                     enc_b_ref, dec_b_ref,
                     enc_whh_ref, dec_whh_ref,
                     h2e_w_ref, h2e_b_ref, e2v_w_ref, e2v_b_ref,
                     logp_ref, loss_ref):
    """Fused S2S forward.

    ids_*    : (T*BP, 1) int32, time-major flattened (row = t*BP + b), PAD rows b>=BATCH
    tbl_*    : (VP, 4H)  fused  emb @ W_ih  tables (gate cols packed, i/f/o prescaled 0.5)
    *_b      : (1, 4H)   b_ih + b_hh, gate-packed, i/f/o prescaled 0.5
    *_whh    : (H, 4H)   bf16 hidden->gates, gate-packed, i/f/o prescaled 0.5
    h2e_w/b  : (H, VLD) / (1, VLD)
    e2v_w/b  : (VLD, VP) / (1, VP)  (padded vocab bias = NEG)
    logp_ref : (T_EN*BP, VP) log-probabilities (time-major rows, lane-dense)
    loss_ref : (1, 1) masked mean NLL
    """
    f32 = jnp.float32
    bf16 = jnp.bfloat16
    H = HIDDEN_DIM

    ids_de = ids_de_ref[...]                                   # (T_DE*BP, 1) i32
    ids_en = ids_en_ref[...]                                   # (T_EN*BP, 1) i32

    # ---- one-hots (exact: all ids < 128) ----
    lane_de = lax.broadcasted_iota(jnp.int32, (T_DE * BP, VP), 1)
    lane_en = lax.broadcasted_iota(jnp.int32, (T_EN * BP, VP), 1)
    oh_de = (lane_de == ids_de).astype(f32)                    # (T_DE*BP, VP)
    oh_en = (lane_en == ids_en).astype(f32)                    # (T_EN*BP, VP)

    # ---- fused embedding + input projection: one K=128 matmul per stream ----
    gx_enc = (jnp.dot(oh_de, tbl_de_ref[...], preferred_element_type=f32)
              + enc_b_ref[...])                                # (T_DE*BP, 4H)
    gx_dec = (jnp.dot(oh_en, tbl_en_ref[...], preferred_element_type=f32)
              + dec_b_ref[...])                                # (T_EN*BP, 4H)

    enc_whh = enc_whh_ref[...]                                 # (H, 4H) bf16
    dec_whh = dec_whh_ref[...]

    def lstm_cell(gx_t, h, c, whh):
        # one small MXU push per step (bf16 operands, f32 accumulation)
        gates = gx_t + jnp.dot(h.astype(bf16), whh, preferred_element_type=f32)  # (BP, 4H)
        t = jnp.tanh(gates)                      # single packed transcendental per step
        i = 0.5 * t[:, 0 * H:1 * H] + 0.5        # sigmoid(x) = 0.5*tanh(x/2)+0.5
        f = 0.5 * t[:, 1 * H:2 * H] + 0.5        # (i/f/o columns were prescaled by 0.5)
        g = t[:, 2 * H:3 * H]
        o = 0.5 * t[:, 3 * H:4 * H] + 0.5
        c_new = f * c + i * g
        h_new = o * jnp.tanh(c_new)
        return h_new, c_new

    h = jnp.zeros((BP, H), f32)
    c = jnp.zeros((BP, H), f32)

    # encoder (fully unrolled, sublane-aligned static slices)
    for t in range(T_DE):
        h, c = lstm_cell(gx_enc[t * BP:(t + 1) * BP, :], h, c, enc_whh)

    # decoder, initialized with encoder final state; hidden states stay in vregs
    dec_hs = []
    for t in range(T_EN):
        h, c = lstm_cell(gx_dec[t * BP:(t + 1) * BP, :], h, c, dec_whh)
        dec_hs.append(h)
    dec_h = jnp.concatenate(dec_hs, axis=0)                    # (T_EN*BP, H)

    # ---- vocab head (Linear -> tanh -> Linear -> LogSoftmax), all f32 ----
    e = jnp.tanh(jnp.dot(dec_h, h2e_w_ref[...], preferred_element_type=f32)
                 + h2e_b_ref[...])                             # (T_EN*BP, VLD)
    # vocab_layer_dropout = 0.0 -> identity
    logits = (jnp.dot(e, e2v_w_ref[...], preferred_element_type=f32)
              + e2v_b_ref[...])                                # (T_EN*BP, VP), pad lanes ~NEG
    m = jnp.max(logits, axis=-1, keepdims=True)
    lse = m + jnp.log(jnp.sum(jnp.exp(logits - m), axis=-1, keepdims=True))
    logp = logits - lse
    logp_ref[...] = logp.astype(logp_ref.dtype)

    # ---- masked NLL loss (gather == dot with the shifted one-hot) ----
    # row n = t*BP + b ; target for (b, t) is x_en[b, t+1] -> row n + BP.
    # PAD-filled batch rows (b >= BATCH) have target PAD and are masked out.
    lp = logp[: (T_EN - 1) * BP, :]                            # ((T_EN-1)*BP, VP)
    tgt_oh = oh_en[BP:, :]                                     # ((T_EN-1)*BP, VP)
    reward = jnp.sum(lp * tgt_oh, axis=-1, keepdims=True)      # ((T_EN-1)*BP, 1)
    no_pad = (ids_en[BP:, :] != PAD_TOKEN).astype(f32)         # ((T_EN-1)*BP, 1)
    num = jnp.sum(reward * no_pad, axis=0, keepdims=True)      # (1, 1)
    den = jnp.sum(no_pad, axis=0, keepdims=True)               # (1, 1)
    loss_ref[...] = -(num / den)


def s2s_pallas(ids_de, ids_en, p):
    return pl.pallas_call(
        s2s_fused_kernel,
        out_shape=(jax.ShapeDtypeStruct((T_EN * BP, VP), jnp.float32),
                   jax.ShapeDtypeStruct((1, 1), jnp.float32)),
        in_specs=[_VMEM] * 12,
        out_specs=(_VMEM, _VMEM),
    )(ids_de, ids_en,
      p["tbl_de"], p["tbl_en"],
      p["enc_b"], p["dec_b"],
      p["enc_whh"], p["dec_whh"],
      p["h2e_w"], p["h2e_b"], p["e2v_w"], p["e2v_b"])


# ----------------------------- parameter init & preprocessing -----------------------------
def init_params(key):
    def randn(k, shape, scale=0.1):
        return scale * jax.random.normal(k, shape, dtype=jnp.float32)

    keys = jax.random.split(key, 12)
    p = {}
    p["emb_de"] = randn(keys[0], (V_DE, WORD_DIM), 1.0)
    p["emb_en"] = randn(keys[1], (V_EN, WORD_DIM), 1.0)
    # LSTM weights stored transposed vs PyTorch: (in, 4H), gate order i,f,g,o
    p["enc_w_ih"] = randn(keys[2], (WORD_DIM, H4))
    p["enc_w_hh"] = randn(keys[3], (HIDDEN_DIM, H4))
    p["enc_b"] = randn(keys[4], (1, H4))                       # b_ih + b_hh
    p["dec_w_ih"] = randn(keys[5], (WORD_DIM, H4))
    p["dec_w_hh"] = randn(keys[6], (HIDDEN_DIM, H4))
    p["dec_b"] = randn(keys[7], (1, H4))
    p["h2e_w"] = randn(keys[8], (HIDDEN_DIM, VOCAB_LAYER_DIM))
    p["h2e_b"] = randn(keys[9], (1, VOCAB_LAYER_DIM))
    p["e2v_w"] = randn(keys[10], (VOCAB_LAYER_DIM, V_EN))
    p["e2v_b"] = randn(keys[11], (1, V_EN))
    return p


def pad_params(p):
    """One-time preprocessing (math unchanged):
       * pack gate columns to 4H=128 lanes and prescale i/f/o cols+bias by 0.5
         (enables the single-tanh gate trick in-kernel),
       * fold embedding @ W_ih into one (VP, 4H) table per language,
       * cast recurrent weights to bf16 (f32 accumulation happens in-kernel),
       * pad the vocab axis to 128 lanes with a finite -1e30 bias."""
    H = HIDDEN_DIM
    f32 = jnp.float32
    gate_scale = jnp.concatenate(
        [jnp.full((1, H), 0.5, f32), jnp.full((1, H), 0.5, f32),
         jnp.ones((1, H), f32), jnp.full((1, H), 0.5, f32)], axis=1)   # (1, 4H)

    emb_de_p = jnp.zeros((VP, WORD_DIM), f32).at[:V_DE].set(p["emb_de"])
    emb_en_p = jnp.zeros((VP, WORD_DIM), f32).at[:V_EN].set(p["emb_en"])

    q = {}
    q["tbl_de"] = emb_de_p @ (p["enc_w_ih"] * gate_scale)      # (VP, 4H)
    q["tbl_en"] = emb_en_p @ (p["dec_w_ih"] * gate_scale)      # (VP, 4H)
    q["enc_b"] = p["enc_b"] * gate_scale                       # (1, 4H)
    q["dec_b"] = p["dec_b"] * gate_scale
    q["enc_whh"] = (p["enc_w_hh"] * gate_scale).astype(jnp.bfloat16)   # (H, 4H)
    q["dec_whh"] = (p["dec_w_hh"] * gate_scale).astype(jnp.bfloat16)
    q["h2e_w"] = p["h2e_w"]                                    # (H, VLD)
    q["h2e_b"] = p["h2e_b"]                                    # (1, VLD)
    q["e2v_w"] = jnp.zeros((VOCAB_LAYER_DIM, VP), f32).at[:, :V_EN].set(p["e2v_w"])
    q["e2v_b"] = jnp.full((1, VP), NEG, f32).at[:, :V_EN].set(p["e2v_b"])
    return q


# ----------------------------- S2S.forward -----------------------------
def s2s_forward(padded_params, x_de, x_en):
    """Mirrors S2S.forward: returns (loss, 0, -loss, pred[:, :-1, :])."""
    bs = x_de.shape[0]

    # pad batch 2 -> 8 with PAD rows (masked out of the loss), time-major flatten
    def prep(x, T):
        xp = jnp.full((BP, T), PAD_TOKEN, jnp.int32).at[:bs].set(x.astype(jnp.int32))
        return xp.T.reshape(-1, 1)                             # (T*BP, 1), row = t*BP + b

    ids_de = prep(x_de, T_DE)
    ids_en = prep(x_en, T_EN)

    logp, loss_mat = s2s_pallas(ids_de, ids_en, padded_params)

    loss = loss_mat[0, 0]
    # reorder once on the tiny log-prob output: time-major rows -> (B, T, V)
    pred = logp.reshape(T_EN, BP, VP)[:, :bs, :V_EN].transpose(1, 0, 2)
    pred_shift = pred[:, :-1, :]
    return loss, 0, -loss, pred_shift


# ----------------------------- main -----------------------------
if __name__ == "__main__":
    key = jax.random.PRNGKey(0)
    k_params, k_de, k_en = jax.random.split(key, 3)

    params = pad_params(init_params(k_params))

    x_de = jax.random.randint(k_de, (BATCH, T_DE), 0, V_DE, dtype=jnp.int32)
    x_en = jax.random.randint(k_en, (BATCH, T_EN), 3, V_EN, dtype=jnp.int32)
    x_en = x_en.at[:, 0].set(SOS_TOKEN)
    x_en = x_en.at[1, -1].set(PAD_TOKEN)           # one padded target position

    loss, _, neg_loss, pred = jax.jit(s2s_forward)(params, x_de, x_en)
    jax.block_until_ready((loss, pred))

    # TODO(synk): predict2 / CandList beam search (stateful top-k bookkeeping)
    # has no clean single-kernel Pallas equivalent and is not ported.
    print("KERNEL_OK")
</pallas_src>

<mosaic_0001>
module attributes {stable_mosaic.version = 11 : i64} {
  func.func @s2s_fused_kernel(%arg0: memref<64x1xi32, #tpu.memory_space<vmem>>, %arg1: memref<64x1xi32, #tpu.memory_space<vmem>>, %arg2: memref<128x128xf32, #tpu.memory_space<vmem>>, %arg3: memref<128x128xf32, #tpu.memory_space<vmem>>, %arg4: memref<1x128xf32, #tpu.memory_space<vmem>>, %arg5: memref<1x128xf32, #tpu.memory_space<vmem>>, %arg6: memref<32x128xbf16, #tpu.memory_space<vmem>>, %arg7: memref<32x128xbf16, #tpu.memory_space<vmem>>, %arg8: memref<32x32xf32, #tpu.memory_space<vmem>>, %arg9: memref<1x32xf32, #tpu.memory_space<vmem>>, %arg10: memref<32x128xf32, #tpu.memory_space<vmem>>, %arg11: memref<1x128xf32, #tpu.memory_space<vmem>>, %arg12: memref<64x128xf32, #tpu.memory_space<vmem>>, %arg13: memref<1x1xf32, #tpu.memory_space<vmem>>) attributes {dimension_semantics = [], scalar_prefetch = 0 : i64, scratch_operands = 0 : i64, tpu.core_type = #tpu.core_type<tc>} {
    %c0 = arith.constant 0 : index
    %c0_0 = arith.constant 0 : index
    %0 = vector.load %arg0[%c0, %c0_0] : memref<64x1xi32, #tpu.memory_space<vmem>>, vector<64x1xi32>
    %c0_1 = arith.constant 0 : index
    %c0_2 = arith.constant 0 : index
    %1 = vector.load %arg1[%c0_1, %c0_2] : memref<64x1xi32, #tpu.memory_space<vmem>>, vector<64x1xi32>
    %2 = tpu.iota {dimensions = array<i32: 1>} : vector<64x128xi32>
    %3 = tpu.iota {dimensions = array<i32: 1>} : vector<64x128xi32>
    %4 = vector.broadcast %0 : vector<64x1xi32> to vector<64x128xi32>
    %5 = arith.cmpi eq, %2, %4 : vector<64x128xi32>
    %6 = arith.extui %5 : vector<64x128xi1> to vector<64x128xi32>
    %7 = arith.sitofp %6 : vector<64x128xi32> to vector<64x128xf32>
    %8 = vector.broadcast %1 : vector<64x1xi32> to vector<64x128xi32>
    %9 = arith.cmpi eq, %3, %8 : vector<64x128xi32>
    %10 = arith.extui %9 : vector<64x128xi1> to vector<64x128xi32>
    %11 = arith.sitofp %10 : vector<64x128xi32> to vector<64x128xf32>
    %c0_3 = arith.constant 0 : index
    %c0_4 = arith.constant 0 : index
    %12 = vector.load %arg2[%c0_3, %c0_4] : memref<128x128xf32, #tpu.memory_space<vmem>>, vector<128x128xf32>
    %cst = arith.constant dense<0.000000e+00> : vector<64x128xf32>
    %13 = tpu.matmul %7, %12, %cst {dimension_numbers = #tpu.dot_dimension_numbers<[1], [0], [0], [1], [0, 0, 1, 1], [], []>} : vector<64x128xf32>, vector<128x128xf32>, vector<64x128xf32> -> vector<64x128xf32>
    %c0_5 = arith.constant 0 : index
    %c0_6 = arith.constant 0 : index
    %14 = vector.load %arg4[%c0_5, %c0_6] : memref<1x128xf32, #tpu.memory_space<vmem>>, vector<1x128xf32>
    %15 = vector.broadcast %14 : vector<1x128xf32> to vector<64x128xf32>
    %16 = arith.addf %13, %15 : vector<64x128xf32>
    %c0_7 = arith.constant 0 : index
    %c0_8 = arith.constant 0 : index
    %17 = vector.load %arg3[%c0_7, %c0_8] : memref<128x128xf32, #tpu.memory_space<vmem>>, vector<128x128xf32>
    %cst_9 = arith.constant dense<0.000000e+00> : vector<64x128xf32>
    %18 = tpu.matmul %11, %17, %cst_9 {dimension_numbers = #tpu.dot_dimension_numbers<[1], [0], [0], [1], [0, 0, 1, 1], [], []>} : vector<64x128xf32>, vector<128x128xf32>, vector<64x128xf32> -> vector<64x128xf32>
    %c0_10 = arith.constant 0 : index
    %c0_11 = arith.constant 0 : index
    %19 = vector.load %arg5[%c0_10, %c0_11] : memref<1x128xf32, #tpu.memory_space<vmem>>, vector<1x128xf32>
    %20 = vector.broadcast %19 : vector<1x128xf32> to vector<64x128xf32>
    %21 = arith.addf %18, %20 : vector<64x128xf32>
    %c0_12 = arith.constant 0 : index
    %c0_13 = arith.constant 0 : index
    %22 = vector.load %arg6[%c0_12, %c0_13] : memref<32x128xbf16, #tpu.memory_space<vmem>>, vector<32x128xbf16>
    %c0_14 = arith.constant 0 : index
    %c0_15 = arith.constant 0 : index
    %23 = vector.load %arg7[%c0_14, %c0_15] : memref<32x128xbf16, #tpu.memory_space<vmem>>, vector<32x128xbf16>
    %cst_16 = arith.constant 0.000000e+00 : f32
    %24 = vector.broadcast %cst_16 : f32 to vector<8x32xf32>
    %cst_17 = arith.constant 0.000000e+00 : f32
    %25 = vector.broadcast %cst_17 : f32 to vector<8x32xf32>
    %26 = vector.extract_strided_slice %16 {offsets = [0, 0], sizes = [8, 128], strides = [1, 1]} : vector<64x128xf32> to vector<8x128xf32>
    %27 = arith.truncf %24 : vector<8x32xf32> to vector<8x32xbf16>
    %cst_18 = arith.constant dense<0.000000e+00> : vector<8x128xf32>
    %28 = tpu.matmul %27, %22, %cst_18 {dimension_numbers = #tpu.dot_dimension_numbers<[1], [0], [0], [1], [0, 0, 1, 1], [], []>} : vector<8x32xbf16>, vector<32x128xbf16>, vector<8x128xf32> -> vector<8x128xf32>
    %29 = arith.addf %26, %28 : vector<8x128xf32>
    %30 = math.tanh %29 : vector<8x128xf32>
    %31 = vector.extract_strided_slice %30 {offsets = [0, 0], sizes = [8, 32], strides = [1, 1]} : vector<8x128xf32> to vector<8x32xf32>
    %cst_19 = arith.constant 5.000000e-01 : f32
    %32 = vector.broadcast %cst_19 : f32 to vector<8x32xf32>
    %33 = arith.mulf %32, %31 : vector<8x32xf32>
    %cst_20 = arith.constant 5.000000e-01 : f32
    %34 = vector.broadcast %cst_20 : f32 to vector<8x32xf32>
    %35 = arith.addf %33, %34 : vector<8x32xf32>
    %36 = vector.extract_strided_slice %30 {offsets = [0, 32], sizes = [8, 32], strides = [1, 1]} : vector<8x128xf32> to vector<8x32xf32>
    %cst_21 = arith.constant 5.000000e-01 : f32
    %37 = vector.broadcast %cst_21 : f32 to vector<8x32xf32>
    %38 = arith.mulf %37, %36 : vector<8x32xf32>
    %cst_22 = arith.constant 5.000000e-01 : f32
    %39 = vector.broadcast %cst_22 : f32 to vector<8x32xf32>
    %40 = arith.addf %38, %39 : vector<8x32xf32>
    %41 = vector.extract_strided_slice %30 {offsets = [0, 64], sizes = [8, 32], strides = [1, 1]} : vector<8x128xf32> to vector<8x32xf32>
    %42 = vector.extract_strided_slice %30 {offsets = [0, 96], sizes = [8, 32], strides = [1, 1]} : vector<8x128xf32> to vector<8x32xf32>
    %cst_23 = arith.constant 5.000000e-01 : f32
    %43 = vector.broadcast %cst_23 : f32 to vector<8x32xf32>
    %44 = arith.mulf %43, %42 : vector<8x32xf32>
    %cst_24 = arith.constant 5.000000e-01 : f32
    %45 = vector.broadcast %cst_24 : f32 to vector<8x32xf32>
    %46 = arith.addf %44, %45 : vector<8x32xf32>
    %47 = arith.mulf %40, %25 : vector<8x32xf32>
    %48 = arith.mulf %35, %41 : vector<8x32xf32>
    %49 = arith.addf %47, %48 : vector<8x32xf32>
    %50 = math.tanh %49 : vector<8x32xf32>
    %51 = arith.mulf %46, %50 : vector<8x32xf32>
    %52 = vector.extract_strided_slice %16 {offsets = [8, 0], sizes = [8, 128], strides = [1, 1]} : vector<64x128xf32> to vector<8x128xf32>
    %53 = arith.truncf %51 : vector<8x32xf32> to vector<8x32xbf16>
    %cst_25 = arith.constant dense<0.000000e+00> : vector<8x128xf32>
    %54 = tpu.matmul %53, %22, %cst_25 {dimension_numbers = #tpu.dot_dimension_numbers<[1], [0], [0], [1], [0, 0, 1, 1], [], []>} : vector<8x32xbf16>, vector<32x128xbf16>, vector<8x128xf32> -> vector<8x128xf32>
    %55 = arith.addf %52, %54 : vector<8x128xf32>
    %56 = math.tanh %55 : vector<8x128xf32>
    %57 = vector.extract_strided_slice %56 {offsets = [0, 0], sizes = [8, 32], strides = [1, 1]} : vector<8x128xf32> to vector<8x32xf32>
    %cst_26 = arith.constant 5.000000e-01 : f32
    %58 = vector.broadcast %cst_26 : f32 to vector<8x32xf32>
    %59 = arith.mulf %58, %57 : vector<8x32xf32>
    %cst_27 = arith.constant 5.000000e-01 : f32
    %60 = vector.broadcast %cst_27 : f32 to vector<8x32xf32>
    %61 = arith.addf %59, %60 : vector<8x32xf32>
    %62 = vector.extract_strided_slice %56 {offsets = [0, 32], sizes = [8, 32], strides = [1, 1]} : vector<8x128xf32> to vector<8x32xf32>
    %cst_28 = arith.constant 5.000000e-01 : f32
    %63 = vector.broadcast %cst_28 : f32 to vector<8x32xf32>
    %64 = arith.mulf %63, %62 : vector<8x32xf32>
    %cst_29 = arith.constant 5.000000e-01 : f32
    %65 = vector.broadcast %cst_29 : f32 to vector<8x32xf32>
    %66 = arith.addf %64, %65 : vector<8x32xf32>
    %67 = vector.extract_strided_slice %56 {offsets = [0, 64], sizes = [8, 32], strides = [1, 1]} : vector<8x128xf32> to vector<8x32xf32>
    %68 = vector.extract_strided_slice %56 {offsets = [0, 96], sizes = [8, 32], strides = [1, 1]} : vector<8x128xf32> to vector<8x32xf32>
    %cst_30 = arith.constant 5.000000e-01 : f32
    %69 = vector.broadcast %cst_30 : f32 to vector<8x32xf32>
    %70 = arith.mulf %69, %68 : vector<8x32xf32>
    %cst_31 = arith.constant 5.000000e-01 : f32
    %71 = vector.broadcast %cst_31 : f32 to vector<8x32xf32>
    %72 = arith.addf %70, %71 : vector<8x32xf32>
    %73 = arith.mulf %66, %49 : vector<8x32xf32>
    %74 = arith.mulf %61, %67 : vector<8x32xf32>
    %75 = arith.addf %73, %74 : vector<8x32xf32>
    %76 = math.tanh %75 : vector<8x32xf32>
    %77 = arith.mulf %72, %76 : vector<8x32xf32>
    %78 = vector.extract_strided_slice %16 {offsets = [16, 0], sizes = [8, 128], strides = [1, 1]} : vector<64x128xf32> to vector<8x128xf32>
    %79 = arith.truncf %77 : vector<8x32xf32> to vector<8x32xbf16>
    %cst_32 = arith.constant dense<0.000000e+00> : vector<8x128xf32>
    %80 = tpu.matmul %79, %22, %cst_32 {dimension_numbers = #tpu.dot_dimension_numbers<[1], [0], [0], [1], [0, 0, 1, 1], [], []>} : vector<8x32xbf16>, vector<32x128xbf16>, vector<8x128xf32> -> vector<8x128xf32>
    %81 = arith.addf %78, %80 : vector<8x128xf32>
    %82 = math.tanh %81 : vector<8x128xf32>
    %83 = vector.extract_strided_slice %82 {offsets = [0, 0], sizes = [8, 32], strides = [1, 1]} : vector<8x128xf32> to vector<8x32xf32>
    %cst_33 = arith.constant 5.000000e-01 : f32
    %84 = vector.broadcast %cst_33 : f32 to vector<8x32xf32>
    %85 = arith.mulf %84, %83 : vector<8x32xf32>
    %cst_34 = arith.constant 5.000000e-01 : f32
    %86 = vector.broadcast %cst_34 : f32 to vector<8x32xf32>
    %87 = arith.addf %85, %86 : vector<8x32xf32>
    %88 = vector.extract_strided_slice %82 {offsets = [0, 32], sizes = [8, 32], strides = [1, 1]} : vector<8x128xf32> to vector<8x32xf32>
    %cst_35 = arith.constant 5.000000e-01 : f32
    %89 = vector.broadcast %cst_35 : f32 to vector<8x32xf32>
    %90 = arith.mulf %89, %88 : vector<8x32xf32>
    %cst_36 = arith.constant 5.000000e-01 : f32
    %91 = vector.broadcast %cst_36 : f32 to vector<8x32xf32>
    %92 = arith.addf %90, %91 : vector<8x32xf32>
    %93 = vector.extract_strided_slice %82 {offsets = [0, 64], sizes = [8, 32], strides = [1, 1]} : vector<8x128xf32> to vector<8x32xf32>
    %94 = vector.extract_strided_slice %82 {offsets = [0, 96], sizes = [8, 32], strides = [1, 1]} : vector<8x128xf32> to vector<8x32xf32>
    %cst_37 = arith.constant 5.000000e-01 : f32
    %95 = vector.broadcast %cst_37 : f32 to vector<8x32xf32>
    %96 = arith.mulf %95, %94 : vector<8x32xf32>
    %cst_38 = arith.constant 5.000000e-01 : f32
    %97 = vector.broadcast %cst_38 : f32 to vector<8x32xf32>
    %98 = arith.addf %96, %97 : vector<8x32xf32>
    %99 = arith.mulf %92, %75 : vector<8x32xf32>
    %100 = arith.mulf %87, %93 : vector<8x32xf32>
    %101 = arith.addf %99, %100 : vector<8x32xf32>
    %102 = math.tanh %101 : vector<8x32xf32>
    %103 = arith.mulf %98, %102 : vector<8x32xf32>
    %104 = vector.extract_strided_slice %16 {offsets = [24, 0], sizes = [8, 128], strides = [1, 1]} : vector<64x128xf32> to vector<8x128xf32>
    %105 = arith.truncf %103 : vector<8x32xf32> to vector<8x32xbf16>
    %cst_39 = arith.constant dense<0.000000e+00> : vector<8x128xf32>
    %106 = tpu.matmul %105, %22, %cst_39 {dimension_numbers = #tpu.dot_dimension_numbers<[1], [0], [0], [1], [0, 0, 1, 1], [], []>} : vector<8x32xbf16>, vector<32x128xbf16>, vector<8x128xf32> -> vector<8x128xf32>
    %107 = arith.addf %104, %106 : vector<8x128xf32>
    %108 = math.tanh %107 : vector<8x128xf32>
    %109 = vector.extract_strided_slice %108 {offsets = [0, 0], sizes = [8, 32], strides = [1, 1]} : vector<8x128xf32> to vector<8x32xf32>
    %cst_40 = arith.constant 5.000000e-01 : f32
    %110 = vector.broadcast %cst_40 : f32 to vector<8x32xf32>
    %111 = arith.mulf %110, %109 : vector<8x32xf32>
    %cst_41 = arith.constant 5.000000e-01 : f32
    %112 = vector.broadcast %cst_41 : f32 to vector<8x32xf32>
    %113 = arith.addf %111, %112 : vector<8x32xf32>
    %114 = vector.extract_strided_slice %108 {offsets = [0, 32], sizes = [8, 32], strides = [1, 1]} : vector<8x128xf32> to vector<8x32xf32>
    %cst_42 = arith.constant 5.000000e-01 : f32
    %115 = vector.broadcast %cst_42 : f32 to vector<8x32xf32>
    %116 = arith.mulf %115, %114 : vector<8x32xf32>
    %cst_43 = arith.constant 5.000000e-01 : f32
    %117 = vector.broadcast %cst_43 : f32 to vector<8x32xf32>
    %118 = arith.addf %116, %117 : vector<8x32xf32>
    %119 = vector.extract_strided_slice %108 {offsets = [0, 64], sizes = [8, 32], strides = [1, 1]} : vector<8x128xf32> to vector<8x32xf32>
    %120 = vector.extract_strided_slice %108 {offsets = [0, 96], sizes = [8, 32], strides = [1, 1]} : vector<8x128xf32> to vector<8x32xf32>
    %cst_44 = arith.constant 5.000000e-01 : f32
    %121 = vector.broadcast %cst_44 : f32 to vector<8x32xf32>
    %122 = arith.mulf %121, %120 : vector<8x32xf32>
    %cst_45 = arith.constant 5.000000e-01 : f32
    %123 = vector.broadcast %cst_45 : f32 to vector<8x32xf32>
    %124 = arith.addf %122, %123 : vector<8x32xf32>
    %125 = arith.mulf %118, %101 : vector<8x32xf32>
    %126 = arith.mulf %113, %119 : vector<8x32xf32>
    %127 = arith.addf %125, %126 : vector<8x32xf32>
    %128 = math.tanh %127 : vector<8x32xf32>
    %129 = arith.mulf %124, %128 : vector<8x32xf32>
    %130 = vector.extract_strided_slice %16 {offsets = [32, 0], sizes = [8, 128], strides = [1, 1]} : vector<64x128xf32> to vector<8x128xf32>
    %131 = arith.truncf %129 : vector<8x32xf32> to vector<8x32xbf16>
    %cst_46 = arith.constant dense<0.000000e+00> : vector<8x128xf32>
    %132 = tpu.matmul %131, %22, %cst_46 {dimension_numbers = #tpu.dot_dimension_numbers<[1], [0], [0], [1], [0, 0, 1, 1], [], []>} : vector<8x32xbf16>, vector<32x128xbf16>, vector<8x128xf32> -> vector<8x128xf32>
    %133 = arith.addf %130, %132 : vector<8x128xf32>
    %134 = math.tanh %133 : vector<8x128xf32>
    %135 = vector.extract_strided_slice %134 {offsets = [0, 0], sizes = [8, 32], strides = [1, 1]} : vector<8x128xf32> to vector<8x32xf32>
    %cst_47 = arith.constant 5.000000e-01 : f32
    %136 = vector.broadcast %cst_47 : f32 to vector<8x32xf32>
    %137 = arith.mulf %136, %135 : vector<8x32xf32>
    %cst_48 = arith.constant 5.000000e-01 : f32
    %138 = vector.broadcast %cst_48 : f32 to vector<8x32xf32>
    %139 = arith.addf %137, %138 : vector<8x32xf32>
    %140 = vector.extract_strided_slice %134 {offsets = [0, 32], sizes = [8, 32], strides = [1, 1]} : vector<8x128xf32> to vector<8x32xf32>
    %cst_49 = arith.constant 5.000000e-01 : f32
    %141 = vector.broadcast %cst_49 : f32 to vector<8x32xf32>
    %142 = arith.mulf %141, %140 : vector<8x32xf32>
    %cst_50 = arith.constant 5.000000e-01 : f32
    %143 = vector.broadcast %cst_50 : f32 to vector<8x32xf32>
    %144 = arith.addf %142, %143 : vector<8x32xf32>
    %145 = vector.extract_strided_slice %134 {offsets = [0, 64], sizes = [8, 32], strides = [1, 1]} : vector<8x128xf32> to vector<8x32xf32>
    %146 = vector.extract_strided_slice %134 {offsets = [0, 96], sizes = [8, 32], strides = [1, 1]} : vector<8x128xf32> to vector<8x32xf32>
    %cst_51 = arith.constant 5.000000e-01 : f32
    %147 = vector.broadcast %cst_51 : f32 to vector<8x32xf32>
    %148 = arith.mulf %147, %146 : vector<8x32xf32>
    %cst_52 = arith.constant 5.000000e-01 : f32
    %149 = vector.broadcast %cst_52 : f32 to vector<8x32xf32>
    %150 = arith.addf %148, %149 : vector<8x32xf32>
    %151 = arith.mulf %144, %127 : vector<8x32xf32>
    %152 = arith.mulf %139, %145 : vector<8x32xf32>
    %153 = arith.addf %151, %152 : vector<8x32xf32>
    %154 = math.tanh %153 : vector<8x32xf32>
    %155 = arith.mulf %150, %154 : vector<8x32xf32>
    %156 = vector.extract_strided_slice %16 {offsets = [40, 0], sizes = [8, 128], strides = [1, 1]} : vector<64x128xf32> to vector<8x128xf32>
    %157 = arith.truncf %155 : vector<8x32xf32> to vector<8x32xbf16>
    %cst_53 = arith.constant dense<0.000000e+00> : vector<8x128xf32>
    %158 = tpu.matmul %157, %22, %cst_53 {dimension_numbers = #tpu.dot_dimension_numbers<[1], [0], [0], [1], [0, 0, 1, 1], [], []>} : vector<8x32xbf16>, vector<32x128xbf16>, vector<8x128xf32> -> vector<8x128xf32>
    %159 = arith.addf %156, %158 : vector<8x128xf32>
    %160 = math.tanh %159 : vector<8x128xf32>
    %161 = vector.extract_strided_slice %160 {offsets = [0, 0], sizes = [8, 32], strides = [1, 1]} : vector<8x128xf32> to vector<8x32xf32>
    %cst_54 = arith.constant 5.000000e-01 : f32
    %162 = vector.broadcast %cst_54 : f32 to vector<8x32xf32>
    %163 = arith.mulf %162, %161 : vector<8x32xf32>
    %cst_55 = arith.constant 5.000000e-01 : f32
    %164 = vector.broadcast %cst_55 : f32 to vector<8x32xf32>
    %165 = arith.addf %163, %164 : vector<8x32xf32>
    %166 = vector.extract_strided_slice %160 {offsets = [0, 32], sizes = [8, 32], strides = [1, 1]} : vector<8x128xf32> to vector<8x32xf32>
    %cst_56 = arith.constant 5.000000e-01 : f32
    %167 = vector.broadcast %cst_56 : f32 to vector<8x32xf32>
    %168 = arith.mulf %167, %166 : vector<8x32xf32>
    %cst_57 = arith.constant 5.000000e-01 : f32
    %169 = vector.broadcast %cst_57 : f32 to vector<8x32xf32>
    %170 = arith.addf %168, %169 : vector<8x32xf32>
    %171 = vector.extract_strided_slice %160 {offsets = [0, 64], sizes = [8, 32], strides = [1, 1]} : vector<8x128xf32> to vector<8x32xf32>
    %172 = vector.extract_strided_slice %160 {offsets = [0, 96], sizes = [8, 32], strides = [1, 1]} : vector<8x128xf32> to vector<8x32xf32>
    %cst_58 = arith.constant 5.000000e-01 : f32
    %173 = vector.broadcast %cst_58 : f32 to vector<8x32xf32>
    %174 = arith.mulf %173, %172 : vector<8x32xf32>
    %cst_59 = arith.constant 5.000000e-01 : f32
    %175 = vector.broadcast %cst_59 : f32 to vector<8x32xf32>
    %176 = arith.addf %174, %175 : vector<8x32xf32>
    %177 = arith.mulf %170, %153 : vector<8x32xf32>
    %178 = arith.mulf %165, %171 : vector<8x32xf32>
    %179 = arith.addf %177, %178 : vector<8x32xf32>
    %180 = math.tanh %179 : vector<8x32xf32>
    %181 = arith.mulf %176, %180 : vector<8x32xf32>
    %182 = vector.extract_strided_slice %16 {offsets = [48, 0], sizes = [8, 128], strides = [1, 1]} : vector<64x128xf32> to vector<8x128xf32>
    %183 = arith.truncf %181 : vector<8x32xf32> to vector<8x32xbf16>
    %cst_60 = arith.constant dense<0.000000e+00> : vector<8x128xf32>
    %184 = tpu.matmul %183, %22, %cst_60 {dimension_numbers = #tpu.dot_dimension_numbers<[1], [0], [0], [1], [0, 0, 1, 1], [], []>} : vector<8x32xbf16>, vector<32x128xbf16>, vector<8x128xf32> -> vector<8x128xf32>
    %185 = arith.addf %182, %184 : vector<8x128xf32>
    %186 = math.tanh %185 : vector<8x128xf32>
    %187 = vector.extract_strided_slice %186 {offsets = [0, 0], sizes = [8, 32], strides = [1, 1]} : vector<8x128xf32> to vector<8x32xf32>
    %cst_61 = arith.constant 5.000000e-01 : f32
    %188 = vector.broadcast %cst_61 : f32 to vector<8x32xf32>
    %189 = arith.mulf %188, %187 : vector<8x32xf32>
    %cst_62 = arith.constant 5.000000e-01 : f32
    %190 = vector.broadcast %cst_62 : f32 to vector<8x32xf32>
    %191 = arith.addf %189, %190 : vector<8x32xf32>
    %192 = vector.extract_strided_slice %186 {offsets = [0, 32], sizes = [8, 32], strides = [1, 1]} : vector<8x128xf32> to vector<8x32xf32>
    %cst_63 = arith.constant 5.000000e-01 : f32
    %193 = vector.broadcast %cst_63 : f32 to vector<8x32xf32>
    %194 = arith.mulf %193, %192 : vector<8x32xf32>
    %cst_64 = arith.constant 5.000000e-01 : f32
    %195 = vector.broadcast %cst_64 : f32 to vector<8x32xf32>
    %196 = arith.addf %194, %195 : vector<8x32xf32>
    %197 = vector.extract_strided_slice %186 {offsets = [0, 64], sizes = [8, 32], strides = [1, 1]} : vector<8x128xf32> to vector<8x32xf32>
    %198 = vector.extract_strided_slice %186 {offsets = [0, 96], sizes = [8, 32], strides = [1, 1]} : vector<8x128xf32> to vector<8x32xf32>
    %cst_65 = arith.constant 5.000000e-01 : f32
    %199 = vector.broadcast %cst_65 : f32 to vector<8x32xf32>
    %200 = arith.mulf %199, %198 : vector<8x32xf32>
    %cst_66 = arith.constant 5.000000e-01 : f32
    %201 = vector.broadcast %cst_66 : f32 to vector<8x32xf32>
    %202 = arith.addf %200, %201 : vector<8x32xf32>
    %203 = arith.mulf %196, %179 : vector<8x32xf32>
    %204 = arith.mulf %191, %197 : vector<8x32xf32>
    %205 = arith.addf %203, %204 : vector<8x32xf32>
    %206 = math.tanh %205 : vector<8x32xf32>
    %207 = arith.mulf %202, %206 : vector<8x32xf32>
    %208 = vector.extract_strided_slice %16 {offsets = [56, 0], sizes = [8, 128], strides = [1, 1]} : vector<64x128xf32> to vector<8x128xf32>
    %209 = arith.truncf %207 : vector<8x32xf32> to vector<8x32xbf16>
    %cst_67 = arith.constant dense<0.000000e+00> : vector<8x128xf32>
    %210 = tpu.matmul %209, %22, %cst_67 {dimension_numbers = #tpu.dot_dimension_numbers<[1], [0], [0], [1], [0, 0, 1, 1], [], []>} : vector<8x32xbf16>, vector<32x128xbf16>, vector<8x128xf32> -> vector<8x128xf32>
    %211 = arith.addf %208, %210 : vector<8x128xf32>
    %212 = math.tanh %211 : vector<8x128xf32>
    %213 = vector.extract_strided_slice %212 {offsets = [0, 0], sizes = [8, 32], strides = [1, 1]} : vector<8x128xf32> to vector<8x32xf32>
    %cst_68 = arith.constant 5.000000e-01 : f32
    %214 = vector.broadcast %cst_68 : f32 to vector<8x32xf32>
    %215 = arith.mulf %214, %213 : vector<8x32xf32>
    %cst_69 = arith.constant 5.000000e-01 : f32
    %216 = vector.broadcast %cst_69 : f32 to vector<8x32xf32>
    %217 = arith.addf %215, %216 : vector<8x32xf32>
    %218 = vector.extract_strided_slice %212 {offsets = [0, 32], sizes = [8, 32], strides = [1, 1]} : vector<8x128xf32> to vector<8x32xf32>
    %cst_70 = arith.constant 5.000000e-01 : f32
    %219 = vector.broadcast %cst_70 : f32 to vector<8x32xf32>
    %220 = arith.mulf %219, %218 : vector<8x32xf32>
    %cst_71 = arith.constant 5.000000e-01 : f32
    %221 = vector.broadcast %cst_71 : f32 to vector<8x32xf32>
    %222 = arith.addf %220, %221 : vector<8x32xf32>
    %223 = vector.extract_strided_slice %212 {offsets = [0, 64], sizes = [8, 32], strides = [1, 1]} : vector<8x128xf32> to vector<8x32xf32>
    %224 = vector.extract_strided_slice %212 {offsets = [0, 96], sizes = [8, 32], strides = [1, 1]} : vector<8x128xf32> to vector<8x32xf32>
    %cst_72 = arith.constant 5.000000e-01 : f32
    %225 = vector.broadcast %cst_72 : f32 to vector<8x32xf32>
    %226 = arith.mulf %225, %224 : vector<8x32xf32>
    %cst_73 = arith.constant 5.000000e-01 : f32
    %227 = vector.broadcast %cst_73 : f32 to vector<8x32xf32>
    %228 = arith.addf %226, %227 : vector<8x32xf32>
    %229 = arith.mulf %222, %205 : vector<8x32xf32>
    %230 = arith.mulf %217, %223 : vector<8x32xf32>
    %231 = arith.addf %229, %230 : vector<8x32xf32>
    %232 = math.tanh %231 : vector<8x32xf32>
    %233 = arith.mulf %228, %232 : vector<8x32xf32>
    %234 = vector.extract_strided_slice %21 {offsets = [0, 0], sizes = [8, 128], strides = [1, 1]} : vector<64x128xf32> to vector<8x128xf32>
    %235 = arith.truncf %233 : vector<8x32xf32> to vector<8x32xbf16>
    %cst_74 = arith.constant dense<0.000000e+00> : vector<8x128xf32>
    %236 = tpu.matmul %235, %23, %cst_74 {dimension_numbers = #tpu.dot_dimension_numbers<[1], [0], [0], [1], [0, 0, 1, 1], [], []>} : vector<8x32xbf16>, vector<32x128xbf16>, vector<8x128xf32> -> vector<8x128xf32>
    %237 = arith.addf %234, %236 : vector<8x128xf32>
    %238 = math.tanh %237 : vector<8x128xf32>
    %239 = vector.extract_strided_slice %238 {offsets = [0, 0], sizes = [8, 32], strides = [1, 1]} : vector<8x128xf32> to vector<8x32xf32>
    %cst_75 = arith.constant 5.000000e-01 : f32
    %240 = vector.broadcast %cst_75 : f32 to vector<8x32xf32>
    %241 = arith.mulf %240, %239 : vector<8x32xf32>
    %cst_76 = arith.constant 5.000000e-01 : f32
    %242 = vector.broadcast %cst_76 : f32 to vector<8x32xf32>
    %243 = arith.addf %241, %242 : vector<8x32xf32>
    %244 = vector.extract_strided_slice %238 {offsets = [0, 32], sizes = [8, 32], strides = [1, 1]} : vector<8x128xf32> to vector<8x32xf32>
    %cst_77 = arith.constant 5.000000e-01 : f32
    %245 = vector.broadcast %cst_77 : f32 to vector<8x32xf32>
    %246 = arith.mulf %245, %244 : vector<8x32xf32>
    %cst_78 = arith.constant 5.000000e-01 : f32
    %247 = vector.broadcast %cst_78 : f32 to vector<8x32xf32>
    %248 = arith.addf %246, %247 : vector<8x32xf32>
    %249 = vector.extract_strided_slice %238 {offsets = [0, 64], sizes = [8, 32], strides = [1, 1]} : vector<8x128xf32> to vector<8x32xf32>
    %250 = vector.extract_strided_slice %238 {offsets = [0, 96], sizes = [8, 32], strides = [1, 1]} : vector<8x128xf32> to vector<8x32xf32>
    %cst_79 = arith.constant 5.000000e-01 : f32
    %251 = vector.broadcast %cst_79 : f32 to vector<8x32xf32>
    %252 = arith.mulf %251, %250 : vector<8x32xf32>
    %cst_80 = arith.constant 5.000000e-01 : f32
    %253 = vector.broadcast %cst_80 : f32 to vector<8x32xf32>
    %254 = arith.addf %252, %253 : vector<8x32xf32>
    %255 = arith.mulf %248, %231 : vector<8x32xf32>
    %256 = arith.mulf %243, %249 : vector<8x32xf32>
    %257 = arith.addf %255, %256 : vector<8x32xf32>
    %258 = math.tanh %257 : vector<8x32xf32>
    %259 = arith.mulf %254, %258 : vector<8x32xf32>
    %260 = vector.extract_strided_slice %21 {offsets = [8, 0], sizes = [8, 128], strides = [1, 1]} : vector<64x128xf32> to vector<8x128xf32>
    %261 = arith.truncf %259 : vector<8x32xf32> to vector<8x32xbf16>
    %cst_81 = arith.constant dense<0.000000e+00> : vector<8x128xf32>
    %262 = tpu.matmul %261, %23, %cst_81 {dimension_numbers = #tpu.dot_dimension_numbers<[1], [0], [0], [1], [0, 0, 1, 1], [], []>} : vector<8x32xbf16>, vector<32x128xbf16>, vector<8x128xf32> -> vector<8x128xf32>
    %263 = arith.addf %260, %262 : vector<8x128xf32>
    %264 = math.tanh %263 : vector<8x128xf32>
    %265 = vector.extract_strided_slice %264 {offsets = [0, 0], sizes = [8, 32], strides = [1, 1]} : vector<8x128xf32> to vector<8x32xf32>
    %cst_82 = arith.constant 5.000000e-01 : f32
    %266 = vector.broadcast %cst_82 : f32 to vector<8x32xf32>
    %267 = arith.mulf %266, %265 : vector<8x32xf32>
    %cst_83 = arith.constant 5.000000e-01 : f32
    %268 = vector.broadcast %cst_83 : f32 to vector<8x32xf32>
    %269 = arith.addf %267, %268 : vector<8x32xf32>
    %270 = vector.extract_strided_slice %264 {offsets = [0, 32], sizes = [8, 32], strides = [1, 1]} : vector<8x128xf32> to vector<8x32xf32>
    %cst_84 = arith.constant 5.000000e-01 : f32
    %271 = vector.broadcast %cst_84 : f32 to vector<8x32xf32>
    %272 = arith.mulf %271, %270 : vector<8x32xf32>
    %cst_85 = arith.constant 5.000000e-01 : f32
    %273 = vector.broadcast %cst_85 : f32 to vector<8x32xf32>
    %274 = arith.addf %272, %273 : vector<8x32xf32>
    %275 = vector.extract_strided_slice %264 {offsets = [0, 64], sizes = [8, 32], strides = [1, 1]} : vector<8x128xf32> to vector<8x32xf32>
    %276 = vector.extract_strided_slice %264 {offsets = [0, 96], sizes = [8, 32], strides = [1, 1]} : vector<8x128xf32> to vector<8x32xf32>
    %cst_86 = arith.constant 5.000000e-01 : f32
    %277 = vector.broadcast %cst_86 : f32 to vector<8x32xf32>
    %278 = arith.mulf %277, %276 : vector<8x32xf32>
    %cst_87 = arith.constant 5.000000e-01 : f32
    %279 = vector.broadcast %cst_87 : f32 to vector<8x32xf32>
    %280 = arith.addf %278, %279 : vector<8x32xf32>
    %281 = arith.mulf %274, %257 : vector<8x32xf32>
    %282 = arith.mulf %269, %275 : vector<8x32xf32>
    %283 = arith.addf %281, %282 : vector<8x32xf32>
    %284 = math.tanh %283 : vector<8x32xf32>
    %285 = arith.mulf %280, %284 : vector<8x32xf32>
    %286 = vector.extract_strided_slice %21 {offsets = [16, 0], sizes = [8, 128], strides = [1, 1]} : vector<64x128xf32> to vector<8x128xf32>
    %287 = arith.truncf %285 : vector<8x32xf32> to vector<8x32xbf16>
    %cst_88 = arith.constant dense<0.000000e+00> : vector<8x128xf32>
    %288 = tpu.matmul %287, %23, %cst_88 {dimension_numbers = #tpu.dot_dimension_numbers<[1], [0], [0], [1], [0, 0, 1, 1], [], []>} : vector<8x32xbf16>, vector<32x128xbf16>, vector<8x128xf32> -> vector<8x128xf32>
    %289 = arith.addf %286, %288 : vector<8x128xf32>
    %290 = math.tanh %289 : vector<8x128xf32>
    %291 = vector.extract_strided_slice %290 {offsets = [0, 0], sizes = [8, 32], strides = [1, 1]} : vector<8x128xf32> to vector<8x32xf32>
    %cst_89 = arith.constant 5.000000e-01 : f32
    %292 = vector.broadcast %cst_89 : f32 to vector<8x32xf32>
    %293 = arith.mulf %292, %291 : vector<8x32xf32>
    %cst_90 = arith.constant 5.000000e-01 : f32
    %294 = vector.broadcast %cst_90 : f32 to vector<8x32xf32>
    %295 = arith.addf %293, %294 : vector<8x32xf32>
    %296 = vector.extract_strided_slice %290 {offsets = [0, 32], sizes = [8, 32], strides = [1, 1]} : vector<8x128xf32> to vector<8x32xf32>
    %cst_91 = arith.constant 5.000000e-01 : f32
    %297 = vector.broadcast %cst_91 : f32 to vector<8x32xf32>
    %298 = arith.mulf %297, %296 : vector<8x32xf32>
    %cst_92 = arith.constant 5.000000e-01 : f32
    %299 = vector.broadcast %cst_92 : f32 to vector<8x32xf32>
    %300 = arith.addf %298, %299 : vector<8x32xf32>
    %301 = vector.extract_strided_slice %290 {offsets = [0, 64], sizes = [8, 32], strides = [1, 1]} : vector<8x128xf32> to vector<8x32xf32>
    %302 = vector.extract_strided_slice %290 {offsets = [0, 96], sizes = [8, 32], strides = [1, 1]} : vector<8x128xf32> to vector<8x32xf32>
    %cst_93 = arith.constant 5.000000e-01 : f32
    %303 = vector.broadcast %cst_93 : f32 to vector<8x32xf32>
    %304 = arith.mulf %303, %302 : vector<8x32xf32>
    %cst_94 = arith.constant 5.000000e-01 : f32
    %305 = vector.broadcast %cst_94 : f32 to vector<8x32xf32>
    %306 = arith.addf %304, %305 : vector<8x32xf32>
    %307 = arith.mulf %300, %283 : vector<8x32xf32>
    %308 = arith.mulf %295, %301 : vector<8x32xf32>
    %309 = arith.addf %307, %308 : vector<8x32xf32>
    %310 = math.tanh %309 : vector<8x32xf32>
    %311 = arith.mulf %306, %310 : vector<8x32xf32>
    %312 = vector.extract_strided_slice %21 {offsets = [24, 0], sizes = [8, 128], strides = [1, 1]} : vector<64x128xf32> to vector<8x128xf32>
    %313 = arith.truncf %311 : vector<8x32xf32> to vector<8x32xbf16>
    %cst_95 = arith.constant dense<0.000000e+00> : vector<8x128xf32>
    %314 = tpu.matmul %313, %23, %cst_95 {dimension_numbers = #tpu.dot_dimension_numbers<[1], [0], [0], [1], [0, 0, 1, 1], [], []>} : vector<8x32xbf16>, vector<32x128xbf16>, vector<8x128xf32> -> vector<8x128xf32>
    %315 = arith.addf %312, %314 : vector<8x128xf32>
    %316 = math.tanh %315 : vector<8x128xf32>
    %317 = vector.extract_strided_slice %316 {offsets = [0, 0], sizes = [8, 32], strides = [1, 1]} : vector<8x128xf32> to vector<8x32xf32>
    %cst_96 = arith.constant 5.000000e-01 : f32
    %318 = vector.broadcast %cst_96 : f32 to vector<8x32xf32>
    %319 = arith.mulf %318, %317 : vector<8x32xf32>
    %cst_97 = arith.constant 5.000000e-01 : f32
    %320 = vector.broadcast %cst_97 : f32 to vector<8x32xf32>
    %321 = arith.addf %319, %320 : vector<8x32xf32>
    %322 = vector.extract_strided_slice %316 {offsets = [0, 32], sizes = [8, 32], strides = [1, 1]} : vector<8x128xf32> to vector<8x32xf32>
    %cst_98 = arith.constant 5.000000e-01 : f32
    %323 = vector.broadcast %cst_98 : f32 to vector<8x32xf32>
    %324 = arith.mulf %323, %322 : vector<8x32xf32>
    %cst_99 = arith.constant 5.000000e-01 : f32
    %325 = vector.broadcast %cst_99 : f32 to vector<8x32xf32>
    %326 = arith.addf %324, %325 : vector<8x32xf32>
    %327 = vector.extract_strided_slice %316 {offsets = [0, 64], sizes = [8, 32], strides = [1, 1]} : vector<8x128xf32> to vector<8x32xf32>
    %328 = vector.extract_strided_slice %316 {offsets = [0, 96], sizes = [8, 32], strides = [1, 1]} : vector<8x128xf32> to vector<8x32xf32>
    %cst_100 = arith.constant 5.000000e-01 : f32
    %329 = vector.broadcast %cst_100 : f32 to vector<8x32xf32>
    %330 = arith.mulf %329, %328 : vector<8x32xf32>
    %cst_101 = arith.constant 5.000000e-01 : f32
    %331 = vector.broadcast %cst_101 : f32 to vector<8x32xf32>
    %332 = arith.addf %330, %331 : vector<8x32xf32>
    %333 = arith.mulf %326, %309 : vector<8x32xf32>
    %334 = arith.mulf %321, %327 : vector<8x32xf32>
    %335 = arith.addf %333, %334 : vector<8x32xf32>
    %336 = math.tanh %335 : vector<8x32xf32>
    %337 = arith.mulf %332, %336 : vector<8x32xf32>
    %338 = vector.extract_strided_slice %21 {offsets = [32, 0], sizes = [8, 128], strides = [1, 1]} : vector<64x128xf32> to vector<8x128xf32>
    %339 = arith.truncf %337 : vector<8x32xf32> to vector<8x32xbf16>
    %cst_102 = arith.constant dense<0.000000e+00> : vector<8x128xf32>
    %340 = tpu.matmul %339, %23, %cst_102 {dimension_numbers = #tpu.dot_dimension_numbers<[1], [0], [0], [1], [0, 0, 1, 1], [], []>} : vector<8x32xbf16>, vector<32x128xbf16>, vector<8x128xf32> -> vector<8x128xf32>
    %341 = arith.addf %338, %340 : vector<8x128xf32>
    %342 = math.tanh %341 : vector<8x128xf32>
    %343 = vector.extract_strided_slice %342 {offsets = [0, 0], sizes = [8, 32], strides = [1, 1]} : vector<8x128xf32> to vector<8x32xf32>
    %cst_103 = arith.constant 5.000000e-01 : f32
    %344 = vector.broadcast %cst_103 : f32 to vector<8x32xf32>
    %345 = arith.mulf %344, %343 : vector<8x32xf32>
    %cst_104 = arith.constant 5.000000e-01 : f32
    %346 = vector.broadcast %cst_104 : f32 to vector<8x32xf32>
    %347 = arith.addf %345, %346 : vector<8x32xf32>
    %348 = vector.extract_strided_slice %342 {offsets = [0, 32], sizes = [8, 32], strides = [1, 1]} : vector<8x128xf32> to vector<8x32xf32>
    %cst_105 = arith.constant 5.000000e-01 : f32
    %349 = vector.broadcast %cst_105 : f32 to vector<8x32xf32>
    %350 = arith.mulf %349, %348 : vector<8x32xf32>
    %cst_106 = arith.constant 5.000000e-01 : f32
    %351 = vector.broadcast %cst_106 : f32 to vector<8x32xf32>
    %352 = arith.addf %350, %351 : vector<8x32xf32>
    %353 = vector.extract_strided_slice %342 {offsets = [0, 64], sizes = [8, 32], strides = [1, 1]} : vector<8x128xf32> to vector<8x32xf32>
    %354 = vector.extract_strided_slice %342 {offsets = [0, 96], sizes = [8, 32], strides = [1, 1]} : vector<8x128xf32> to vector<8x32xf32>
    %cst_107 = arith.constant 5.000000e-01 : f32
    %355 = vector.broadcast %cst_107 : f32 to vector<8x32xf32>
    %356 = arith.mulf %355, %354 : vector<8x32xf32>
    %cst_108 = arith.constant 5.000000e-01 : f32
    %357 = vector.broadcast %cst_108 : f32 to vector<8x32xf32>
    %358 = arith.addf %356, %357 : vector<8x32xf32>
    %359 = arith.mulf %352, %335 : vector<8x32xf32>
    %360 = arith.mulf %347, %353 : vector<8x32xf32>
    %361 = arith.addf %359, %360 : vector<8x32xf32>
    %362 = math.tanh %361 : vector<8x32xf32>
    %363 = arith.mulf %358, %362 : vector<8x32xf32>
    %364 = vector.extract_strided_slice %21 {offsets = [40, 0], sizes = [8, 128], strides = [1, 1]} : vector<64x128xf32> to vector<8x128xf32>
    %365 = arith.truncf %363 : vector<8x32xf32> to vector<8x32xbf16>
    %cst_109 = arith.constant dense<0.000000e+00> : vector<8x128xf32>
    %366 = tpu.matmul %365, %23, %cst_109 {dimension_numbers = #tpu.dot_dimension_numbers<[1], [0], [0], [1], [0, 0, 1, 1], [], []>} : vector<8x32xbf16>, vector<32x128xbf16>, vector<8x128xf32> -> vector<8x128xf32>
    %367 = arith.addf %364, %366 : vector<8x128xf32>
    %368 = math.tanh %367 : vector<8x128xf32>
    %369 = vector.extract_strided_slice %368 {offsets = [0, 0], sizes = [8, 32], strides = [1, 1]} : vector<8x128xf32> to vector<8x32xf32>
    %cst_110 = arith.constant 5.000000e-01 : f32
    %370 = vector.broadcast %cst_110 : f32 to vector<8x32xf32>
    %371 = arith.mulf %370, %369 : vector<8x32xf32>
    %cst_111 = arith.constant 5.000000e-01 : f32
    %372 = vector.broadcast %cst_111 : f32 to vector<8x32xf32>
    %373 = arith.addf %371, %372 : vector<8x32xf32>
    %374 = vector.extract_strided_slice %368 {offsets = [0, 32], sizes = [8, 32], strides = [1, 1]} : vector<8x128xf32> to vector<8x32xf32>
    %cst_112 = arith.constant 5.000000e-01 : f32
    %375 = vector.broadcast %cst_112 : f32 to vector<8x32xf32>
    %376 = arith.mulf %375, %374 : vector<8x32xf32>
    %cst_113 = arith.constant 5.000000e-01 : f32
    %377 = vector.broadcast %cst_113 : f32 to vector<8x32xf32>
    %378 = arith.addf %376, %377 : vector<8x32xf32>
    %379 = vector.extract_strided_slice %368 {offsets = [0, 64], sizes = [8, 32], strides = [1, 1]} : vector<8x128xf32> to vector<8x32xf32>
    %380 = vector.extract_strided_slice %368 {offsets = [0, 96], sizes = [8, 32], strides = [1, 1]} : vector<8x128xf32> to vector<8x32xf32>
    %cst_114 = arith.constant 5.000000e-01 : f32
    %381 = vector.broadcast %cst_114 : f32 to vector<8x32xf32>
    %382 = arith.mulf %381, %380 : vector<8x32xf32>
    %cst_115 = arith.constant 5.000000e-01 : f32
    %383 = vector.broadcast %cst_115 : f32 to vector<8x32xf32>
    %384 = arith.addf %382, %383 : vector<8x32xf32>
    %385 = arith.mulf %378, %361 : vector<8x32xf32>
    %386 = arith.mulf %373, %379 : vector<8x32xf32>
    %387 = arith.addf %385, %386 : vector<8x32xf32>
    %388 = math.tanh %387 : vector<8x32xf32>
    %389 = arith.mulf %384, %388 : vector<8x32xf32>
    %390 = vector.extract_strided_slice %21 {offsets = [48, 0], sizes = [8, 128], strides = [1, 1]} : vector<64x128xf32> to vector<8x128xf32>
    %391 = arith.truncf %389 : vector<8x32xf32> to vector<8x32xbf16>
    %cst_116 = arith.constant dense<0.000000e+00> : vector<8x128xf32>
    %392 = tpu.matmul %391, %23, %cst_116 {dimension_numbers = #tpu.dot_dimension_numbers<[1], [0], [0], [1], [0, 0, 1, 1], [], []>} : vector<8x32xbf16>, vector<32x128xbf16>, vector<8x128xf32> -> vector<8x128xf32>
    %393 = arith.addf %390, %392 : vector<8x128xf32>
    %394 = math.tanh %393 : vector<8x128xf32>
    %395 = vector.extract_strided_slice %394 {offsets = [0, 0], sizes = [8, 32], strides = [1, 1]} : vector<8x128xf32> to vector<8x32xf32>
    %cst_117 = arith.constant 5.000000e-01 : f32
    %396 = vector.broadcast %cst_117 : f32 to vector<8x32xf32>
    %397 = arith.mulf %396, %395 : vector<8x32xf32>
    %cst_118 = arith.constant 5.000000e-01 : f32
    %398 = vector.broadcast %cst_118 : f32 to vector<8x32xf32>
    %399 = arith.addf %397, %398 : vector<8x32xf32>
    %400 = vector.extract_strided_slice %394 {offsets = [0, 32], sizes = [8, 32], strides = [1, 1]} : vector<8x128xf32> to vector<8x32xf32>
    %cst_119 = arith.constant 5.000000e-01 : f32
    %401 = vector.broadcast %cst_119 : f32 to vector<8x32xf32>
    %402 = arith.mulf %401, %400 : vector<8x32xf32>
    %cst_120 = arith.constant 5.000000e-01 : f32
    %403 = vector.broadcast %cst_120 : f32 to vector<8x32xf32>
    %404 = arith.addf %402, %403 : vector<8x32xf32>
    %405 = vector.extract_strided_slice %394 {offsets = [0, 64], sizes = [8, 32], strides = [1, 1]} : vector<8x128xf32> to vector<8x32xf32>
    %406 = vector.extract_strided_slice %394 {offsets = [0, 96], sizes = [8, 32], strides = [1, 1]} : vector<8x128xf32> to vector<8x32xf32>
    %cst_121 = arith.constant 5.000000e-01 : f32
    %407 = vector.broadcast %cst_121 : f32 to vector<8x32xf32>
    %408 = arith.mulf %407, %406 : vector<8x32xf32>
    %cst_122 = arith.constant 5.000000e-01 : f32
    %409 = vector.broadcast %cst_122 : f32 to vector<8x32xf32>
    %410 = arith.addf %408, %409 : vector<8x32xf32>
    %411 = arith.mulf %404, %387 : vector<8x32xf32>
    %412 = arith.mulf %399, %405 : vector<8x32xf32>
    %413 = arith.addf %411, %412 : vector<8x32xf32>
    %414 = math.tanh %413 : vector<8x32xf32>
    %415 = arith.mulf %410, %414 : vector<8x32xf32>
    %416 = vector.extract_strided_slice %21 {offsets = [56, 0], sizes = [8, 128], strides = [1, 1]} : vector<64x128xf32> to vector<8x128xf32>
    %417 = arith.truncf %415 : vector<8x32xf32> to vector<8x32xbf16>
    %cst_123 = arith.constant dense<0.000000e+00> : vector<8x128xf32>
    %418 = tpu.matmul %417, %23, %cst_123 {dimension_numbers = #tpu.dot_dimension_numbers<[1], [0], [0], [1], [0, 0, 1, 1], [], []>} : vector<8x32xbf16>, vector<32x128xbf16>, vector<8x128xf32> -> vector<8x128xf32>
    %419 = arith.addf %416, %418 : vector<8x128xf32>
    %420 = math.tanh %419 : vector<8x128xf32>
    %421 = vector.extract_strided_slice %420 {offsets = [0, 0], sizes = [8, 32], strides = [1, 1]} : vector<8x128xf32> to vector<8x32xf32>
    %cst_124 = arith.constant 5.000000e-01 : f32
    %422 = vector.broadcast %cst_124 : f32 to vector<8x32xf32>
    %423 = arith.mulf %422, %421 : vector<8x32xf32>
    %cst_125 = arith.constant 5.000000e-01 : f32
    %424 = vector.broadcast %cst_125 : f32 to vector<8x32xf32>
    %425 = arith.addf %423, %424 : vector<8x32xf32>
    %426 = vector.extract_strided_slice %420 {offsets = [0, 32], sizes = [8, 32], strides = [1, 1]} : vector<8x128xf32> to vector<8x32xf32>
    %cst_126 = arith.constant 5.000000e-01 : f32
    %427 = vector.broadcast %cst_126 : f32 to vector<8x32xf32>
    %428 = arith.mulf %427, %426 : vector<8x32xf32>
    %cst_127 = arith.constant 5.000000e-01 : f32
    %429 = vector.broadcast %cst_127 : f32 to vector<8x32xf32>
    %430 = arith.addf %428, %429 : vector<8x32xf32>
    %431 = vector.extract_strided_slice %420 {offsets = [0, 64], sizes = [8, 32], strides = [1, 1]} : vector<8x128xf32> to vector<8x32xf32>
    %432 = vector.extract_strided_slice %420 {offsets = [0, 96], sizes = [8, 32], strides = [1, 1]} : vector<8x128xf32> to vector<8x32xf32>
    %cst_128 = arith.constant 5.000000e-01 : f32
    %433 = vector.broadcast %cst_128 : f32 to vector<8x32xf32>
    %434 = arith.mulf %433, %432 : vector<8x32xf32>
    %cst_129 = arith.constant 5.000000e-01 : f32
    %435 = vector.broadcast %cst_129 : f32 to vector<8x32xf32>
    %436 = arith.addf %434, %435 : vector<8x32xf32>
    %437 = arith.mulf %430, %413 : vector<8x32xf32>
    %438 = arith.mulf %425, %431 : vector<8x32xf32>
    %439 = arith.addf %437, %438 : vector<8x32xf32>
    %440 = math.tanh %439 : vector<8x32xf32>
    %441 = arith.mulf %436, %440 : vector<8x32xf32>
    %442 = tpu.concatenate %259, %285, %311, %337, %363, %389, %415, %441 in 0 : vector<8x32xf32>, vector<8x32xf32>, vector<8x32xf32>, vector<8x32xf32>, vector<8x32xf32>, vector<8x32xf32>, vector<8x32xf32>, vector<8x32xf32> -> vector<64x32xf32>
    %c0_130 = arith.constant 0 : index
    %c0_131 = arith.constant 0 : index
    %443 = vector.load %arg8[%c0_130, %c0_131] : memref<32x32xf32, #tpu.memory_space<vmem>>, vector<32x32xf32>
    %cst_132 = arith.constant dense<0.000000e+00> : vector<64x32xf32>
    %444 = tpu.matmul %442, %443, %cst_132 {dimension_numbers = #tpu.dot_dimension_numbers<[1], [0], [0], [1], [0, 0, 1, 1], [], []>} : vector<64x32xf32>, vector<32x32xf32>, vector<64x32xf32> -> vector<64x32xf32>
    %c0_133 = arith.constant 0 : index
    %c0_134 = arith.constant 0 : index
    %445 = vector.load %arg9[%c0_133, %c0_134] : memref<1x32xf32, #tpu.memory_space<vmem>>, vector<1x32xf32>
    %446 = vector.broadcast %445 : vector<1x32xf32> to vector<64x32xf32>
    %447 = arith.addf %444, %446 : vector<64x32xf32>
    %448 = math.tanh %447 : vector<64x32xf32>
    %c0_135 = arith.constant 0 : index
    %c0_136 = arith.constant 0 : index
    %449 = vector.load %arg10[%c0_135, %c0_136] : memref<32x128xf32, #tpu.memory_space<vmem>>, vector<32x128xf32>
    %cst_137 = arith.constant dense<0.000000e+00> : vector<64x128xf32>
    %450 = tpu.matmul %448, %449, %cst_137 {dimension_numbers = #tpu.dot_dimension_numbers<[1], [0], [0], [1], [0, 0, 1, 1], [], []>} : vector<64x32xf32>, vector<32x128xf32>, vector<64x128xf32> -> vector<64x128xf32>
    %c0_138 = arith.constant 0 : index
    %c0_139 = arith.constant 0 : index
    %451 = vector.load %arg11[%c0_138, %c0_139] : memref<1x128xf32, #tpu.memory_space<vmem>>, vector<1x128xf32>
    %452 = vector.broadcast %451 : vector<1x128xf32> to vector<64x128xf32>
    %453 = arith.addf %450, %452 : vector<64x128xf32>
    %cst_140 = arith.constant dense<0xFF800000> : vector<64xf32>
    %454 = vector.multi_reduction <maximumf>, %453, %cst_140 [1] : vector<64x128xf32> to vector<64xf32>
    %455 = vector.shape_cast %454 : vector<64xf32> to vector<64x1xf32>
    %456 = vector.broadcast %455 : vector<64x1xf32> to vector<64x128xf32>
    %457 = arith.subf %453, %456 : vector<64x128xf32>
    %458 = math.exp %457 : vector<64x128xf32>
    %cst_141 = arith.constant dense<0.000000e+00> : vector<64xf32>
    %459 = vector.multi_reduction <add>, %458, %cst_141 [1] : vector<64x128xf32> to vector<64xf32>
    %460 = vector.shape_cast %459 : vector<64xf32> to vector<64x1xf32>
    %461 = math.log %460 : vector<64x1xf32>
    %462 = arith.addf %455, %461 : vector<64x1xf32>
    %463 = vector.broadcast %462 : vector<64x1xf32> to vector<64x128xf32>
    %464 = arith.subf %453, %463 : vector<64x128xf32>
    %c0_142 = arith.constant 0 : index
    %c0_143 = arith.constant 0 : index
    %465 = vector.load %arg12[%c0_142, %c0_143] : memref<64x128xf32, #tpu.memory_space<vmem>>, vector<64x128xf32>
    tpu.vector_store %arg12[%c0_142, %c0_143], %464 {strides = array<i32>} : memref<64x128xf32, #tpu.memory_space<vmem>>, vector<64x128xf32>,
    %466 = vector.extract_strided_slice %464 {offsets = [0, 0], sizes = [56, 128], strides = [1, 1]} : vector<64x128xf32> to vector<56x128xf32>
    %467 = vector.extract_strided_slice %11 {offsets = [8, 0], sizes = [56, 128], strides = [1, 1]} : vector<64x128xf32> to vector<56x128xf32>
    %468 = arith.mulf %466, %467 : vector<56x128xf32>
    %cst_144 = arith.constant dense<0.000000e+00> : vector<56xf32>
    %469 = vector.multi_reduction <add>, %468, %cst_144 [1] : vector<56x128xf32> to vector<56xf32>
    %470 = vector.shape_cast %469 : vector<56xf32> to vector<56x1xf32>
    %471 = vector.extract_strided_slice %1 {offsets = [8, 0], sizes = [56, 1], strides = [1, 1]} : vector<64x1xi32> to vector<56x1xi32>
    %c1_i32 = arith.constant 1 : i32
    %472 = vector.broadcast %c1_i32 : i32 to vector<56x1xi32>
    %473 = arith.cmpi ne, %471, %472 : vector<56x1xi32>
    %474 = arith.extui %473 : vector<56x1xi1> to vector<56x1xi32>
    %475 = arith.sitofp %474 : vector<56x1xi32> to vector<56x1xf32>
    %476 = arith.mulf %470, %475 : vector<56x1xf32>
    %cst_145 = arith.constant dense<0.000000e+00> : vector<1xf32>
    %477 = vector.multi_reduction <add>, %476, %cst_145 [0] : vector<56x1xf32> to vector<1xf32>
    %478 = vector.shape_cast %477 : vector<1xf32> to vector<1x1xf32>
    %cst_146 = arith.constant dense<0.000000e+00> : vector<1xf32>
    %479 = vector.multi_reduction <add>, %475, %cst_146 [0] : vector<56x1xf32> to vector<1xf32>
    %480 = vector.shape_cast %479 : vector<1xf32> to vector<1x1xf32>
    %481 = arith.divf %478, %480 : vector<1x1xf32>
    %cst_147 = arith.constant 0.000000e+00 : f32
    %482 = vector.broadcast %cst_147 : f32 to vector<1x1xf32>
    %483 = arith.subf %482, %481 : vector<1x1xf32>
    %c0_148 = arith.constant 0 : index
    %c0_149 = arith.constant 0 : index
    %484 = vector.load %arg13[%c0_148, %c0_149] : memref<1x1xf32, #tpu.memory_space<vmem>>, vector<1x1xf32>
    tpu.vector_store %arg13[%c0_148, %c0_149], %483 {strides = array<i32>} : memref<1x1xf32, #tpu.memory_space<vmem>>, vector<1x1xf32>,
    return
  }
}

</mosaic_0001>

<llo_original>
// kernel: s2s_forward.1
$region0: #{s2s_forward.1}
  #allocation0 [shape = 'u32[]', space=smem, size = 0x4, offset = 0x4, fixed_abs, tag = 'smem constant byte address 0x4 - core index']
  #allocation1 [shape = 'u32[72,128]{1,0:T(1,128)}', space=vmem, size = 0x9000, scoped, tag = 'internal scratch']
  %s0 = inlined_call_operand.vmem [shape: s32[64,1], index: 0, kind: input, shape index: {}]
  %s1 = inlined_call_operand.vmem [shape: s32[64,1], index: 1, kind: input, shape index: {}]
  %s2 = inlined_call_operand.vmem [shape: f32[128,128], index: 2, kind: input, shape index: {}]
  %s3 = inlined_call_operand.hbm [shape: f32[128,128], index: 3, kind: input, shape index: {}]
  %s4 = inlined_call_operand.vmem [shape: f32[1,128], index: 4, kind: input, shape index: {}]
  %s5 = inlined_call_operand.vmem [shape: f32[1,128], index: 5, kind: input, shape index: {}]
  %s6 = inlined_call_operand.hbm [shape: bf16[32,128], index: 6, kind: input, shape index: {}]
  %s7 = inlined_call_operand.hbm [shape: bf16[32,128], index: 7, kind: input, shape index: {}]
  %s8 = inlined_call_operand.vmem [shape: f32[32,32], index: 8, kind: input, shape index: {}]
  %s9 = inlined_call_operand.vmem [shape: f32[1,32], index: 9, kind: input, shape index: {}]
  %s10 = inlined_call_operand.vmem [shape: f32[32,128], index: 10, kind: input, shape index: {}]
  %s11 = inlined_call_operand.vmem [shape: f32[1,128], index: 11, kind: input, shape index: {}]
  %s12 = inlined_call_operand.vmem [shape: f32[64,128], index: 12, kind: output, shape index: {0}]
  %s13 = inlined_call_operand.hbm [shape: f32[1,1], index: 13, kind: output, shape index: {1}]
  %14 = xla_tuple %s12, %s13
  %s15 = sld [smem:[#allocation0]]
  $region78: #{s2s_forward.1} parent=0
    _
  %s17 = ssub.s32 1, %s15
  %s18 = scalar_select 0, %s17, %s15
  $region1: #{s2s_forward.1} parent=0
    #allocation2 [shape = 'u8[65536]{0}', space=vmem, size = 0x10000, scoped, tag = 'input window, operand 3, single buffered']
    #allocation3 [shape = 's32[1]{0}', space=sflag, size = 0x4, scoped, tag = 'scoped memory for s2s_forward.1']
    #allocation4 [shape = 's32[1]{0}', space=sflag, size = 0x4, scoped, tag = 'scoped memory for s2s_forward.1']
    #allocation5 [shape = 'u8[8192]{0}', space=vmem, size = 0x2000, scoped, tag = 'input window, operand 6, single buffered']
    #allocation6 [shape = 's32[1]{0}', space=sflag, size = 0x4, scoped, tag = 'scoped memory for s2s_forward.1']
    #allocation7 [shape = 'u8[8192]{0}', space=vmem, size = 0x2000, scoped, tag = 'input window, operand 7, single buffered']
    #allocation8 [shape = 'u8[512]{0}', space=vmem, size = 0x400, scoped, tag = 'output window, operand 1, single buffered']
    %19 = vsyncpa [#allocation3], 0
    %20 = vsyncpa [#allocation6], 0
    %21 = vsyncpa [#allocation4], 0
    // Predicated region
    $region2: #{s2s_forward.1} parent=1 // pred_check
      _
    $region3: #{s2s_forward.1} parent=1 // pred_check_branch
      %23 = sbr.rel (0) target = $region5
    $region4: #{s2s_forward.1} parent=1 // pred_region
      _
    $region5: #{s2s_forward.1} parent=1 // pred_fallthru
      _
    // Predicated region
    $region6: #{s2s_forward.1} parent=1 // pred_check
      _
    $region7: #{s2s_forward.1} parent=1 // pred_check_branch
      %25 = sbr.rel (0) target = $region9
    $region8: #{s2s_forward.1} parent=1 // pred_region
      _
    $region9: #{s2s_forward.1} parent=1 // pred_fallthru
      _
    // Predicated region
    $region10: #{s2s_forward.1} parent=1 // pred_check
      _
    $region11: #{s2s_forward.1} parent=1 // pred_check_branch
      %27 = sbr.rel (0) target = $region13
    $region12: #{s2s_forward.1} parent=1 // pred_region
      _
    $region13: #{s2s_forward.1} parent=1 // pred_fallthru
      _
    // Predicated region
    $region14: #{s2s_forward.1} parent=1 // pred_check
      _
    $region15: #{s2s_forward.1} parent=1 // pred_check_branch
      %29 = sbr.rel (0) target = $region17
    $region16: #{s2s_forward.1} parent=1 // pred_region
      %31 = vsyncadd [#allocation3], 0
      %s32 = sshll.u32 %s3, 4
      %s33 = int_to_ptr.hbm [resolvable:$true] %s32
      %s34 = sshll.u32 [#allocation2], 4
      %s35 = int_to_ptr.vmem [resolvable:$true] %s34
      %40 = dma.hbm_to_vmem [thread:$0]  %s33, 2048, %s35, [#allocation3], 128, 128, 8
    $region17: #{s2s_forward.1} parent=1 // pred_fallthru
      _
    // Predicated region
    $region18: #{s2s_forward.1} parent=1 // pred_check
      _
    $region19: #{s2s_forward.1} parent=1 // pred_check_branch
      %42 = sbr.rel (0) target = $region21
    $region20: #{s2s_forward.1} parent=1 // pred_region
      _
    $region21: #{s2s_forward.1} parent=1 // pred_fallthru
      _
    // Predicated region
    $region22: #{s2s_forward.1} parent=1 // pred_check
      _
    $region23: #{s2s_forward.1} parent=1 // pred_check_branch
      %44 = sbr.rel (0) target = $region25
    $region24: #{s2s_forward.1} parent=1 // pred_region
      _
    $region25: #{s2s_forward.1} parent=1 // pred_fallthru
      _
    // Predicated region
    $region26: #{s2s_forward.1} parent=1 // pred_check
      _
    $region27: #{s2s_forward.1} parent=1 // pred_check_branch
      %46 = sbr.rel (0) target = $region29
    $region28: #{s2s_forward.1} parent=1 // pred_region
      %48 = vsyncadd [#allocation6], 0
      %s49 = sshll.u32 %s6, 4
      %s50 = int_to_ptr.hbm [resolvable:$true] %s49
      %s51 = sshll.u32 [#allocation5], 4
      %s52 = int_to_ptr.vmem [resolvable:$true] %s51
      %57 = dma.hbm_to_vmem [thread:$0]  %s50, 256, %s52, [#allocation6], 64, 64, 4
    $region29: #{s2s_forward.1} parent=1 // pred_fallthru
      _
    // Predicated region
    $region30: #{s2s_forward.1} parent=1 // pred_check
      _
    $region31: #{s2s_forward.1} parent=1 // pred_check_branch
      %59 = sbr.rel (0) target = $region33
    $region32: #{s2s_forward.1} parent=1 // pred_region
      %61 = vsyncadd [#allocation6], 0
      %s62 = sshll.u32 %s7, 4
      %s63 = int_to_ptr.hbm [resolvable:$true] %s62
      %s64 = sshll.u32 [#allocation7], 4
      %s65 = int_to_ptr.vmem [resolvable:$true] %s64
      %70 = dma.hbm_to_vmem [thread:$0]  %s63, 256, %s65, [#allocation6], 64, 64, 4
    $region33: #{s2s_forward.1} parent=1 // pred_fallthru
      _
    // Predicated region
    $region34: #{s2s_forward.1} parent=1 // pred_check
      _
    $region35: #{s2s_forward.1} parent=1 // pred_check_branch
      %72 = sbr.rel (0) target = $region37
    $region36: #{s2s_forward.1} parent=1 // pred_region
      _
    $region37: #{s2s_forward.1} parent=1 // pred_fallthru
      _
    // Predicated region
    $region38: #{s2s_forward.1} parent=1 // pred_check
      _
    $region39: #{s2s_forward.1} parent=1 // pred_check_branch
      %74 = sbr.rel (0) target = $region41
    $region40: #{s2s_forward.1} parent=1 // pred_region
      _
    $region41: #{s2s_forward.1} parent=1 // pred_fallthru
      _
    // Predicated region
    $region42: #{s2s_forward.1} parent=1 // pred_check
      _
    $region43: #{s2s_forward.1} parent=1 // pred_check_branch
      %76 = sbr.rel (0) target = $region45
    $region44: #{s2s_forward.1} parent=1 // pred_region
      _
    $region45: #{s2s_forward.1} parent=1 // pred_fallthru
      _
    // Predicated region
    $region46: #{s2s_forward.1} parent=1 // pred_check
      _
    $region47: #{s2s_forward.1} parent=1 // pred_check_branch
      %78 = sbr.rel (0) target = $region49
    $region48: #{s2s_forward.1} parent=1 // pred_region
      _
    $region49: #{s2s_forward.1} parent=1 // pred_fallthru
      _
    // Predicated region
    $region50: #{s2s_forward.1} parent=1 // pred_check
      _
    $region51: #{s2s_forward.1} parent=1 // pred_check_branch
      %80 = sbr.rel (0) target = $region53
    $region52: #{s2s_forward.1} parent=1 // pred_region
      %82 = dma.done [#allocation3], 2048
    $region53: #{s2s_forward.1} parent=1 // pred_fallthru
      _
    // Predicated region
    $region54: #{s2s_forward.1} parent=1 // pred_check
      _
    $region55: #{s2s_forward.1} parent=1 // pred_check_branch
      %84 = sbr.rel (0) target = $region57
    $region56: #{s2s_forward.1} parent=1 // pred_region
      %86 = dma.done [#allocation6], 256
    $region57: #{s2s_forward.1} parent=1 // pred_fallthru
      _
    // Predicated region
    $region58: #{s2s_forward.1} parent=1 // pred_check
      _
    $region59: #{s2s_forward.1} parent=1 // pred_check_branch
      %88 = sbr.rel (0) target = $region61
    $region60: #{s2s_forward.1} parent=1 // pred_region
      %90 = dma.done [#allocation6], 256
    $region61: #{s2s_forward.1} parent=1 // pred_fallthru
      _
    %v92 = vld [vmem:[%s0] sm:$0xff]
    %v93 = vld [vmem:[%s0 + $0x8] sm:$0xff]
    %v94 = vld [vmem:[%s0 + $0x10] sm:$0xff]
    %v95 = vld [vmem:[%s0 + $0x18] sm:$0xff]
    %v96 = vld [vmem:[%s0 + $0x20] sm:$0xff]
    %v97 = vld [vmem:[%s0 + $0x28] sm:$0xff]
    %v98 = vld [vmem:[%s0 + $0x30] sm:$0xff]
    %v99 = vld [vmem:[%s0 + $0x38] sm:$0xff]
    %v100 = vld [vmem:[%s1] sm:$0xff]
    %v101 = vld [vmem:[%s1 + $0x8] sm:$0xff]
    %v102 = vld [vmem:[%s1 + $0x10] sm:$0xff]
    %v103 = vld [vmem:[%s1 + $0x18] sm:$0xff]
    %v104 = vld [vmem:[%s1 + $0x20] sm:$0xff]
    %v105 = vld [vmem:[%s1 + $0x28] sm:$0xff]
    %v106 = vld [vmem:[%s1 + $0x30] sm:$0xff]
    %v107 = vld [vmem:[%s1 + $0x38] sm:$0xff]
    %v108 = vlaneseq
    %v109 = vand.u32 %v108, 127
    %110 = vset.pattern.permute.xlu0 0
    %111 = vperm.xlu0 %110, %v92
    %v112 = vpop.permute.xlu0 %111
    %113 = vset.pattern.permute.xlu0 0
    %114 = vperm.xlu0 %113, %v93
    %v115 = vpop.permute.xlu0 %114
    %116 = vset.pattern.permute.xlu0 0
    %117 = vperm.xlu0 %116, %v94
    %v118 = vpop.permute.xlu0 %117
    %119 = vset.pattern.permute.xlu0 0
    %120 = vperm.xlu0 %119, %v95
    %v121 = vpop.permute.xlu0 %120
    %122 = vset.pattern.permute.xlu0 0
    %123 = vperm.xlu0 %122, %v96
    %v124 = vpop.permute.xlu0 %123
    %125 = vset.pattern.permute.xlu0 0
    %126 = vperm.xlu0 %125, %v97
    %v127 = vpop.permute.xlu0 %126
    %128 = vset.pattern.permute.xlu0 0
    %129 = vperm.xlu0 %128, %v98
    %v130 = vpop.permute.xlu0 %129
    %131 = vset.pattern.permute.xlu0 0
    %132 = vperm.xlu0 %131, %v99
    %v133 = vpop.permute.xlu0 %132
    %vm134 = vcmp.eq.s32.totalorder %v109, %v112
    %vm135 = vcmp.eq.s32.totalorder %v109, %v115
    %vm136 = vcmp.eq.s32.totalorder %v109, %v118
    %vm137 = vcmp.eq.s32.totalorder %v109, %v121
    %vm138 = vcmp.eq.s32.totalorder %v109, %v124
    %vm139 = vcmp.eq.s32.totalorder %v109, %v127
    %vm140 = vcmp.eq.s32.totalorder %v109, %v130
    %vm141 = vcmp.eq.s32.totalorder %v109, %v133
    %v142 = vsel %vm134, 1, 0
    %v143 = vsel %vm135, 1, 0
    %v144 = vsel %vm136, 1, 0
    %v145 = vsel %vm137, 1, 0
    %v146 = vsel %vm138, 1, 0
    %v147 = vsel %vm139, 1, 0
    %v148 = vsel %vm140, 1, 0
    %v149 = vsel %vm141, 1, 0
    %v150 = vcvt.s32.f32 %v142
    %v151 = vcvt.s32.f32 %v143
    %v152 = vcvt.s32.f32 %v144
    %v153 = vcvt.s32.f32 %v145
    %v154 = vcvt.s32.f32 %v146
    %v155 = vcvt.s32.f32 %v147
    %v156 = vcvt.s32.f32 %v148
    %v157 = vcvt.s32.f32 %v149
    %158 = vset.pattern.permute.xlu0 0
    %159 = vperm.xlu0 %158, %v100
    %v160 = vpop.permute.xlu0 %159
    %161 = vset.pattern.permute.xlu0 0
    %162 = vperm.xlu0 %161, %v101
    %v163 = vpop.permute.xlu0 %162
    %164 = vset.pattern.permute.xlu0 0
    %165 = vperm.xlu0 %164, %v102
    %v166 = vpop.permute.xlu0 %165
    %167 = vset.pattern.permute.xlu0 0
    %168 = vperm.xlu0 %167, %v103
    %v169 = vpop.permute.xlu0 %168
    %170 = vset.pattern.permute.xlu0 0
    %171 = vperm.xlu0 %170, %v104
    %v172 = vpop.permute.xlu0 %171
    %173 = vset.pattern.permute.xlu0 0
    %174 = vperm.xlu0 %173, %v105
    %v175 = vpop.permute.xlu0 %174
    %176 = vset.pattern.permute.xlu0 0
    %177 = vperm.xlu0 %176, %v106
    %v178 = vpop.permute.xlu0 %177
    %179 = vset.pattern.permute.xlu0 0
    %180 = vperm.xlu0 %179, %v107
    %v181 = vpop.permute.xlu0 %180
    %vm182 = vcmp.eq.s32.totalorder %v109, %v160
    %vm183 = vcmp.eq.s32.totalorder %v109, %v163
    %vm184 = vcmp.eq.s32.totalorder %v109, %v166
    %vm185 = vcmp.eq.s32.totalorder %v109, %v169
    %vm186 = vcmp.eq.s32.totalorder %v109, %v172
    %vm187 = vcmp.eq.s32.totalorder %v109, %v175
    %vm188 = vcmp.eq.s32.totalorder %v109, %v178
    %vm189 = vcmp.eq.s32.totalorder %v109, %v181
    %v190 = vsel %vm182, 1, 0
    %v191 = vsel %vm183, 1, 0
    %v192 = vsel %vm184, 1, 0
    %v193 = vsel %vm185, 1, 0
    %v194 = vsel %vm186, 1, 0
    %v195 = vsel %vm187, 1, 0
    %v196 = vsel %vm188, 1, 0
    %v197 = vsel %vm189, 1, 0
    %v198 = vcvt.s32.f32 %v190
    %v199 = vcvt.s32.f32 %v191
    %v200 = vcvt.s32.f32 %v192
    %v201 = vcvt.s32.f32 %v193
    %v202 = vcvt.s32.f32 %v194
    %v203 = vcvt.s32.f32 %v195
    %v204 = vcvt.s32.f32 %v196
    %v205 = vcvt.s32.f32 %v197
    %v206 = vld [vmem:[%s2] sm:$0xff]
    %v207 = vld [vmem:[%s2 + $0x8] sm:$0xff]
    %v208 = vld [vmem:[%s2 + $0x10] sm:$0xff]
    %v209 = vld [vmem:[%s2 + $0x18] sm:$0xff]
    %v210 = vld [vmem:[%s2 + $0x20] sm:$0xff]
    %v211 = vld [vmem:[%s2 + $0x28] sm:$0xff]
    %v212 = vld [vmem:[%s2 + $0x30] sm:$0xff]
    %v213 = vld [vmem:[%s2 + $0x38] sm:$0xff]
    %v214 = vld [vmem:[%s2 + $0x40] sm:$0xff]
    %v215 = vld [vmem:[%s2 + $0x48] sm:$0xff]
    %v216 = vld [vmem:[%s2 + $0x50] sm:$0xff]
    %v217 = vld [vmem:[%s2 + $0x58] sm:$0xff]
    %v218 = vld [vmem:[%s2 + $0x60] sm:$0xff]
    %v219 = vld [vmem:[%s2 + $0x68] sm:$0xff]
    %v220 = vld [vmem:[%s2 + $0x70] sm:$0xff]
    %v221 = vld [vmem:[%s2 + $0x78] sm:$0xff]
    %v222 = vld [vmem:[%s4] sm:$0x1]
    %v224 = vperm.slane %v222, 0
    %226 = vmatpush.msra.mxu0 %v221
    %227 = vmatpush.msra.mxu0 %v220
    %228 = vmatpush.msra.mxu0 %v219
    %229 = vmatpush.msra.mxu0 %v218
    %230 = vmatpush.msra.mxu0 %v217
    %231 = vmatpush.msra.mxu0 %v216
    %232 = vmatpush.msra.mxu0 %v215
    %233 = vmatpush.msra.mxu0 %v214
    %234 = vmatpush.msra.mxu0 %v213
    %235 = vmatpush.msra.mxu0 %v212
    %236 = vmatpush.msra.mxu0 %v211
    %237 = vmatpush.msra.mxu0 %v210
    %238 = vmatpush.msra.mxu0 %v209
    %239 = vmatpush.msra.mxu0 %v208
    %240 = vmatpush.msra.mxu0 %v207
    %241 = vmatpush.msra.mxu0 %v206
    %242 = vmatmul.f32.gmra.mxu0 %v150
    %v243 = vpop.f32.mrf.mxu0
    %v244 = vadd.f32 %v224, %v243
    %245 = vmatmul.f32.gmra.mxu0 %v151
    %v246 = vpop.f32.mrf.mxu0
    %v247 = vadd.f32 %v224, %v246
    %248 = vmatmul.f32.gmra.mxu0 %v152
    %v249 = vpop.f32.mrf.mxu0
    %v250 = vadd.f32 %v224, %v249
    %251 = vmatmul.f32.gmra.mxu0 %v153
    %v252 = vpop.f32.mrf.mxu0
    %v253 = vadd.f32 %v224, %v252
    %254 = vmatmul.f32.gmra.mxu0 %v154
    %v255 = vpop.f32.mrf.mxu0
    %v256 = vadd.f32 %v224, %v255
    %257 = vmatmul.f32.gmra.mxu0 %v155
    %v258 = vpop.f32.mrf.mxu0
    %v259 = vadd.f32 %v224, %v258
    %260 = vmatmul.f32.gmra.mxu0 %v156
    %v261 = vpop.f32.mrf.mxu0
    %v262 = vadd.f32 %v224, %v261
    %263 = vmatmul.f32.gmra.mxu0 %v157
    %v264 = vpop.f32.mrf.mxu0
    %v265 = vadd.f32 %v224, %v264
    %266 = vdwg.mxu0
    %v267 = vld [vmem:[#allocation2] sm:$0xff]
    %v268 = vld [vmem:[#allocation2 + $0x8] sm:$0xff]
    %v269 = vld [vmem:[#allocation2 + $0x10] sm:$0xff]
    %v270 = vld [vmem:[#allocation2 + $0x18] sm:$0xff]
    %v271 = vld [vmem:[#allocation2 + $0x20] sm:$0xff]
    %v272 = vld [vmem:[#allocation2 + $0x28] sm:$0xff]
    %v273 = vld [vmem:[#allocation2 + $0x30] sm:$0xff]
    %v274 = vld [vmem:[#allocation2 + $0x38] sm:$0xff]
    %v275 = vld [vmem:[#allocation2 + $0x40] sm:$0xff]
    %v276 = vld [vmem:[#allocation2 + $0x48] sm:$0xff]
    %v277 = vld [vmem:[#allocation2 + $0x50] sm:$0xff]
    %v278 = vld [vmem:[#allocation2 + $0x58] sm:$0xff]
    %v279 = vld [vmem:[#allocation2 + $0x60] sm:$0xff]
    %v280 = vld [vmem:[#allocation2 + $0x68] sm:$0xff]
    %v281 = vld [vmem:[#allocation2 + $0x70] sm:$0xff]
    %v282 = vld [vmem:[#allocation2 + $0x78] sm:$0xff]
    %v283 = vld [vmem:[%s5] sm:$0x1]
    %v285 = vperm.slane %v283, 0
    %287 = vmatpush.msra.mxu0 %v282
    %288 = vmatpush.msra.mxu0 %v281
    %289 = vmatpush.msra.mxu0 %v280
    %290 = vmatpush.msra.mxu0 %v279
    %291 = vmatpush.msra.mxu0 %v278
    %292 = vmatpush.msra.mxu0 %v277
    %293 = vmatpush.msra.mxu0 %v276
    %294 = vmatpush.msra.mxu0 %v275
    %295 = vmatpush.msra.mxu0 %v274
    %296 = vmatpush.msra.mxu0 %v273
    %297 = vmatpush.msra.mxu0 %v272
    %298 = vmatpush.msra.mxu0 %v271
    %299 = vmatpush.msra.mxu0 %v270
    %300 = vmatpush.msra.mxu0 %v269
    %301 = vmatpush.msra.mxu0 %v268
    %302 = vmatpush.msra.mxu0 %v267
    %303 = vmatmul.f32.gmra.mxu0 %v198
    %v304 = vpop.f32.mrf.mxu0
    %v305 = vadd.f32 %v285, %v304
    %306 = vmatmul.f32.gmra.mxu0 %v199
    %v307 = vpop.f32.mrf.mxu0
    %v308 = vadd.f32 %v285, %v307
    %309 = vmatmul.f32.gmra.mxu0 %v200
    %v310 = vpop.f32.mrf.mxu0
    %v311 = vadd.f32 %v285, %v310
    %312 = vmatmul.f32.gmra.mxu0 %v201
    %v313 = vpop.f32.mrf.mxu0
    %v314 = vadd.f32 %v285, %v313
    %315 = vmatmul.f32.gmra.mxu0 %v202
    %v316 = vpop.f32.mrf.mxu0
    %v317 = vadd.f32 %v285, %v316
    %318 = vmatmul.f32.gmra.mxu0 %v203
    %v319 = vpop.f32.mrf.mxu0
    %v320 = vadd.f32 %v285, %v319
    %321 = vmatmul.f32.gmra.mxu0 %v204
    %v322 = vpop.f32.mrf.mxu0
    %v323 = vadd.f32 %v285, %v322
    %324 = vmatmul.f32.gmra.mxu0 %v205
    %v325 = vpop.f32.mrf.mxu0
    %v326 = vadd.f32 %v285, %v325
    %327 = vdwg.mxu0
    %v328 = vld [vmem:[#allocation5] sm:$0xf]
    %v329 = vld [vmem:[#allocation5 + $0x4] sm:$0xf]
    %v330 = vld [vmem:[#allocation5 + $0x8] sm:$0xf]
    %v331 = vld [vmem:[#allocation5 + $0xc] sm:$0xf]
    %v332 = vld [vmem:[#allocation7] sm:$0xf]
    %v333 = vld [vmem:[#allocation7 + $0x4] sm:$0xf]
    %v334 = vld [vmem:[#allocation7 + $0x8] sm:$0xf]
    %v335 = vld [vmem:[#allocation7 + $0xc] sm:$0xf]
    %v340 = vunpack.c.l.b16 %v328
    %v341 = vunpack.c.l.b16 %v329
    %v342 = vunpack.c.l.b16 %v330
    %v343 = vunpack.c.l.b16 %v331
    %v344 = vpack.c.b16 %v341, %v340
    %v345 = vpack.c.b16 %v343, %v342
    %vm348 = vcmask 261120
    %v350 = vsel %vm348, 0, 0
    %352 = vmatpush.bf16.msra.mxu0 0
    %353 = vmatpush.bf16.msra.mxu0 0
    %354 = vmatpush.bf16.msra.mxu0 0
    %355 = vmatpush.bf16.msra.mxu0 0
    %356 = vmatpush.bf16.msra.mxu0 0
    %357 = vmatpush.bf16.msra.mxu0 0
    %358 = vmatpush.bf16.msra.mxu0 %v345
    %359 = vmatpush.bf16.msra.mxu0 %v344
    %360 = vmatmul.bf16.gmra.mxu0 %v350
    %v361 = vpop.f32.mrf.mxu0
    %v362 = vadd.f32 0.0, %v361
    %v363 = vpop.f32.mrf.mxu0
    %364 = vdwg.mxu0
    %v365 = vadd.f32 %v244, %v362
    %v366 = vtanh.pop %v365
    %v367 = vmul.f32 %v366, 0.5
    %v368 = vadd.f32 %v367, 0.5
    %v369 = vmul.f32 %v368, 0.0
    %371 = vrot.lane.b32.xlu0 %v366, 64
    %v372 = vpop.permute.xlu0 %371
    %v374 = vmul.f32 %v368, %v372
    %376 = vrot.lane.b32.xlu0 %v374, 32
    %v377 = vpop.permute.xlu0 %376
    %v379 = vadd.f32 %v369, %v377
    %v380 = vtanh.pop %v379
    %382 = vrot.lane.b32.xlu0 %v380, 64
    %v383 = vpop.permute.xlu0 %382
    %v385 = vmul.f32 %v368, %v383
    %v386 = vpack.c.bf16 %v385, %v385
    %388 = vrot.lane.b32.xlu0 %v386, 32
    %v389 = vpop.permute.xlu0 %388
    %v391 = vsel %vm348, %v389, 0
    %393 = vmatpush.bf16.msra.mxu0 0
    %394 = vmatpush.bf16.msra.mxu0 0
    %395 = vmatpush.bf16.msra.mxu0 0
    %396 = vmatpush.bf16.msra.mxu0 0
    %397 = vmatpush.bf16.msra.mxu0 0
    %398 = vmatpush.bf16.msra.mxu0 0
    %399 = vmatpush.bf16.msra.mxu0 %v345
    %400 = vmatpush.bf16.msra.mxu0 %v344
    %401 = vmatmul.bf16.gmra.mxu0 %v391
    %v402 = vpop.f32.mrf.mxu0
    %v403 = vadd.f32 0.0, %v402
    %v404 = vpop.f32.mrf.mxu0
    %405 = vdwg.mxu0
    %v406 = vadd.f32 %v247, %v403
    %v407 = vtanh.pop %v406
    %v408 = vmul.f32 %v407, 0.5
    %v409 = vadd.f32 %v408, 0.5
    %v410 = vmul.f32 %v409, %v379
    %412 = vrot.lane.b32.xlu0 %v407, 64
    %v413 = vpop.permute.xlu0 %412
    %v415 = vmul.f32 %v409, %v413
    %417 = vrot.lane.b32.xlu0 %v415, 32
    %v418 = vpop.permute.xlu0 %417
    %v420 = vadd.f32 %v410, %v418
    %v421 = vtanh.pop %v420
    %423 = vrot.lane.b32.xlu0 %v421, 64
    %v424 = vpop.permute.xlu0 %423
    %v426 = vmul.f32 %v409, %v424
    %v427 = vpack.c.bf16 %v426, %v426
    %429 = vrot.lane.b32.xlu0 %v427, 32
    %v430 = vpop.permute.xlu0 %429
    %v432 = vsel %vm348, %v430, 0
    %434 = vmatpush.bf16.msra.mxu0 0
    %435 = vmatpush.bf16.msra.mxu0 0
    %436 = vmatpush.bf16.msra.mxu0 0
    %437 = vmatpush.bf16.msra.mxu0 0
    %438 = vmatpush.bf16.msra.mxu0 0
    %439 = vmatpush.bf16.msra.mxu0 0
    %440 = vmatpush.bf16.msra.mxu0 %v345
    %441 = vmatpush.bf16.msra.mxu0 %v344
    %442 = vmatmul.bf16.gmra.mxu0 %v432
    %v443 = vpop.f32.mrf.mxu0
    %v444 = vadd.f32 0.0, %v443
    %v445 = vpop.f32.mrf.mxu0
    %446 = vdwg.mxu0
    %v447 = vadd.f32 %v250, %v444
    %v448 = vtanh.pop %v447
    %v449 = vmul.f32 %v448, 0.5
    %v450 = vadd.f32 %v449, 0.5
    %v451 = vmul.f32 %v450, %v420
    %453 = vrot.lane.b32.xlu0 %v448, 64
    %v454 = vpop.permute.xlu0 %453
    %v456 = vmul.f32 %v450, %v454
    %458 = vrot.lane.b32.xlu0 %v456, 32
    %v459 = vpop.permute.xlu0 %458
    %v461 = vadd.f32 %v451, %v459
    %v462 = vtanh.pop %v461
    %464 = vrot.lane.b32.xlu0 %v462, 64
    %v465 = vpop.permute.xlu0 %464
    %v467 = vmul.f32 %v450, %v465
    %v468 = vpack.c.bf16 %v467, %v467
    %470 = vrot.lane.b32.xlu0 %v468, 32
    %v471 = vpop.permute.xlu0 %470
    %v473 = vsel %vm348, %v471, 0
    %475 = vmatpush.bf16.msra.mxu0 0
    %476 = vmatpush.bf16.msra.mxu0 0
    %477 = vmatpush.bf16.msra.mxu0 0
    %478 = vmatpush.bf16.msra.mxu0 0
    %479 = vmatpush.bf16.msra.mxu0 0
    %480 = vmatpush.bf16.msra.mxu0 0
    %481 = vmatpush.bf16.msra.mxu0 %v345
    %482 = vmatpush.bf16.msra.mxu0 %v344
    %483 = vmatmul.bf16.gmra.mxu0 %v473
    %v484 = vpop.f32.mrf.mxu0
    %v485 = vadd.f32 0.0, %v484
    %v486 = vpop.f32.mrf.mxu0
    %487 = vdwg.mxu0
    %v488 = vadd.f32 %v253, %v485
    %v489 = vtanh.pop %v488
    %v490 = vmul.f32 %v489, 0.5
    %v491 = vadd.f32 %v490, 0.5
    %v492 = vmul.f32 %v491, %v461
    %494 = vrot.lane.b32.xlu0 %v489, 64
    %v495 = vpop.permute.xlu0 %494
    %v497 = vmul.f32 %v491, %v495
    %499 = vrot.lane.b32.xlu0 %v497, 32
    %v500 = vpop.permute.xlu0 %499
    %v502 = vadd.f32 %v492, %v500
    %v503 = vtanh.pop %v502
    %505 = vrot.lane.b32.xlu0 %v503, 64
    %v506 = vpop.permute.xlu0 %505
    %v508 = vmul.f32 %v491, %v506
    %v509 = vpack.c.bf16 %v508, %v508
    %511 = vrot.lane.b32.xlu0 %v509, 32
    %v512 = vpop.permute.xlu0 %511
    %v514 = vsel %vm348, %v512, 0
    %516 = vmatpush.bf16.msra.mxu0 0
    %517 = vmatpush.bf16.msra.mxu0 0
    %518 = vmatpush.bf16.msra.mxu0 0
    %519 = vmatpush.bf16.msra.mxu0 0
    %520 = vmatpush.bf16.msra.mxu0 0
    %521 = vmatpush.bf16.msra.mxu0 0
    %522 = vmatpush.bf16.msra.mxu0 %v345
    %523 = vmatpush.bf16.msra.mxu0 %v344
    %524 = vmatmul.bf16.gmra.mxu0 %v514
    %v525 = vpop.f32.mrf.mxu0
    %v526 = vadd.f32 0.0, %v525
    %v527 = vpop.f32.mrf.mxu0
    %528 = vdwg.mxu0
    %v529 = vadd.f32 %v256, %v526
    %v530 = vtanh.pop %v529
    %v531 = vmul.f32 %v530, 0.5
    %v532 = vadd.f32 %v531, 0.5
    %v533 = vmul.f32 %v532, %v502
    %535 = vrot.lane.b32.xlu0 %v530, 64
    %v536 = vpop.permute.xlu0 %535
    %v538 = vmul.f32 %v532, %v536
    %540 = vrot.lane.b32.xlu0 %v538, 32
    %v541 = vpop.permute.xlu0 %540
    %v543 = vadd.f32 %v533, %v541
    %v544 = vtanh.pop %v543
    %546 = vrot.lane.b32.xlu0 %v544, 64
    %v547 = vpop.permute.xlu0 %546
    %v549 = vmul.f32 %v532, %v547
    %v550 = vpack.c.bf16 %v549, %v549
    %552 = vrot.lane.b32.xlu0 %v550, 32
    %v553 = vpop.permute.xlu0 %552
    %v555 = vsel %vm348, %v553, 0
    %557 = vmatpush.bf16.msra.mxu0 0
    %558 = vmatpush.bf16.msra.mxu0 0
    %559 = vmatpush.bf16.msra.mxu0 0
    %560 = vmatpush.bf16.msra.mxu0 0
    %561 = vmatpush.bf16.msra.mxu0 0
    %562 = vmatpush.bf16.msra.mxu0 0
    %563 = vmatpush.bf16.msra.mxu0 %v345
    %564 = vmatpush.bf16.msra.mxu0 %v344
    %565 = vmatmul.bf16.gmra.mxu0 %v555
    %v566 = vpop.f32.mrf.mxu0
    %v567 = vadd.f32 0.0, %v566
    %v568 = vpop.f32.mrf.mxu0
    %569 = vdwg.mxu0
    %v570 = vadd.f32 %v259, %v567
    %v571 = vtanh.pop %v570
    %v572 = vmul.f32 %v571, 0.5
    %v573 = vadd.f32 %v572, 0.5
    %v574 = vmul.f32 %v573, %v543
    %576 = vrot.lane.b32.xlu0 %v571, 64
    %v577 = vpop.permute.xlu0 %576
    %v579 = vmul.f32 %v573, %v577
    %581 = vrot.lane.b32.xlu0 %v579, 32
    %v582 = vpop.permute.xlu0 %581
    %v584 = vadd.f32 %v574, %v582
    %v585 = vtanh.pop %v584
    %587 = vrot.lane.b32.xlu0 %v585, 64
    %v588 = vpop.permute.xlu0 %587
    %v590 = vmul.f32 %v573, %v588
    %v591 = vpack.c.bf16 %v590, %v590
    %593 = vrot.lane.b32.xlu0 %v591, 32
    %v594 = vpop.permute.xlu0 %593
    %v596 = vsel %vm348, %v594, 0
    %598 = vmatpush.bf16.msra.mxu0 0
    %599 = vmatpush.bf16.msra.mxu0 0
    %600 = vmatpush.bf16.msra.mxu0 0
    %601 = vmatpush.bf16.msra.mxu0 0
    %602 = vmatpush.bf16.msra.mxu0 0
    %603 = vmatpush.bf16.msra.mxu0 0
    %604 = vmatpush.bf16.msra.mxu0 %v345
    %605 = vmatpush.bf16.msra.mxu0 %v344
    %606 = vmatmul.bf16.gmra.mxu0 %v596
    %v607 = vpop.f32.mrf.mxu0
    %v608 = vadd.f32 0.0, %v607
    %v609 = vpop.f32.mrf.mxu0
    %610 = vdwg.mxu0
    %v611 = vadd.f32 %v262, %v608
    %v612 = vtanh.pop %v611
    %v613 = vmul.f32 %v612, 0.5
    %v614 = vadd.f32 %v613, 0.5
    %v615 = vmul.f32 %v614, %v584
    %617 = vrot.lane.b32.xlu0 %v612, 64
    %v618 = vpop.permute.xlu0 %617
    %v620 = vmul.f32 %v614, %v618
    %622 = vrot.lane.b32.xlu0 %v620, 32
    %v623 = vpop.permute.xlu0 %622
    %v625 = vadd.f32 %v615, %v623
    %v626 = vtanh.pop %v625
    %628 = vrot.lane.b32.xlu0 %v626, 64
    %v629 = vpop.permute.xlu0 %628
    %v631 = vmul.f32 %v614, %v629
    %v632 = vpack.c.bf16 %v631, %v631
    %634 = vrot.lane.b32.xlu0 %v632, 32
    %v635 = vpop.permute.xlu0 %634
    %v637 = vsel %vm348, %v635, 0
    %639 = vmatpush.bf16.msra.mxu0 0
    %640 = vmatpush.bf16.msra.mxu0 0
    %641 = vmatpush.bf16.msra.mxu0 0
    %642 = vmatpush.bf16.msra.mxu0 0
    %643 = vmatpush.bf16.msra.mxu0 0
    %644 = vmatpush.bf16.msra.mxu0 0
    %645 = vmatpush.bf16.msra.mxu0 %v345
    %646 = vmatpush.bf16.msra.mxu0 %v344
    %647 = vmatmul.bf16.gmra.mxu0 %v637
    %v648 = vpop.f32.mrf.mxu0
    %v649 = vadd.f32 0.0, %v648
    %v650 = vpop.f32.mrf.mxu0
    %651 = vdwg.mxu0
    %v652 = vadd.f32 %v265, %v649
    %v653 = vtanh.pop %v652
    %v654 = vmul.f32 %v653, 0.5
    %v655 = vadd.f32 %v654, 0.5
    %v656 = vmul.f32 %v655, %v625
    %658 = vrot.lane.b32.xlu0 %v653, 64
    %v659 = vpop.permute.xlu0 %658
    %v661 = vmul.f32 %v655, %v659
    %663 = vrot.lane.b32.xlu0 %v661, 32
    %v664 = vpop.permute.xlu0 %663
    %v666 = vadd.f32 %v656, %v664
    %v667 = vtanh.pop %v666
    %669 = vrot.lane.b32.xlu0 %v667, 64
    %v670 = vpop.permute.xlu0 %669
    %v672 = vmul.f32 %v655, %v670
    %v673 = vpack.c.bf16 %v672, %v672
    %675 = vrot.lane.b32.xlu0 %v673, 32
    %v676 = vpop.permute.xlu0 %675
    %v681 = vunpack.c.l.b16 %v332
    %v682 = vunpack.c.l.b16 %v333
    %v683 = vunpack.c.l.b16 %v334
    %v684 = vunpack.c.l.b16 %v335
    %v685 = vpack.c.b16 %v682, %v681
    %v686 = vpack.c.b16 %v684, %v683
    %v690 = vsel %vm348, %v676, 0
    %692 = vmatpush.bf16.msra.mxu0 0
    %693 = vmatpush.bf16.msra.mxu0 0
    %694 = vmatpush.bf16.msra.mxu0 0
    %695 = vmatpush.bf16.msra.mxu0 0
    %696 = vmatpush.bf16.msra.mxu0 0
    %697 = vmatpush.bf16.msra.mxu0 0
    %698 = vmatpush.bf16.msra.mxu0 %v686
    %699 = vmatpush.bf16.msra.mxu0 %v685
    %700 = vmatmul.bf16.gmra.mxu0 %v690
    %v701 = vpop.f32.mrf.mxu0
    %v702 = vadd.f32 0.0, %v701
    %v703 = vpop.f32.mrf.mxu0
    %704 = vdwg.mxu0
    %v705 = vadd.f32 %v305, %v702
    %v706 = vtanh.pop %v705
    %v707 = vmul.f32 %v706, 0.5
    %v708 = vadd.f32 %v707, 0.5
    %v709 = vmul.f32 %v708, %v666
    %711 = vrot.lane.b32.xlu0 %v706, 64
    %v712 = vpop.permute.xlu0 %711
    %v714 = vmul.f32 %v708, %v712
    %716 = vrot.lane.b32.xlu0 %v714, 32
    %v717 = vpop.permute.xlu0 %716
    %v719 = vadd.f32 %v709, %v717
    %v720 = vtanh.pop %v719
    %722 = vrot.lane.b32.xlu0 %v720, 64
    %v723 = vpop.permute.xlu0 %722
    %v725 = vmul.f32 %v708, %v723
    %v726 = vpack.c.bf16 %v725, %v725
    %728 = vrot.lane.b32.xlu0 %v726, 32
    %v729 = vpop.permute.xlu0 %728
    %v731 = vsel %vm348, %v729, 0
    %733 = vmatpush.bf16.msra.mxu0 0
    %734 = vmatpush.bf16.msra.mxu0 0
    %735 = vmatpush.bf16.msra.mxu0 0
    %736 = vmatpush.bf16.msra.mxu0 0
    %737 = vmatpush.bf16.msra.mxu0 0
    %738 = vmatpush.bf16.msra.mxu0 0
    %739 = vmatpush.bf16.msra.mxu0 %v686
    %740 = vmatpush.bf16.msra.mxu0 %v685
    %741 = vmatmul.bf16.gmra.mxu0 %v731
    %v742 = vpop.f32.mrf.mxu0
    %v743 = vadd.f32 0.0, %v742
    %v744 = vpop.f32.mrf.mxu0
    %745 = vdwg.mxu0
    %v746 = vadd.f32 %v308, %v743
    %v747 = vtanh.pop %v746
    %v748 = vmul.f32 %v747, 0.5
    %v749 = vadd.f32 %v748, 0.5
    %v750 = vmul.f32 %v749, %v719
    %752 = vrot.lane.b32.xlu0 %v747, 64
    %v753 = vpop.permute.xlu0 %752
    %v755 = vmul.f32 %v749, %v753
    %757 = vrot.lane.b32.xlu0 %v755, 32
    %v758 = vpop.permute.xlu0 %757
    %v760 = vadd.f32 %v750, %v758
    %v761 = vtanh.pop %v760
    %763 = vrot.lane.b32.xlu0 %v761, 64
    %v764 = vpop.permute.xlu0 %763
    %v766 = vmul.f32 %v749, %v764
    %v767 = vpack.c.bf16 %v766, %v766
    %769 = vrot.lane.b32.xlu0 %v767, 32
    %v770 = vpop.permute.xlu0 %769
    %v772 = vsel %vm348, %v770, 0
    %774 = vmatpush.bf16.msra.mxu0 0
    %775 = vmatpush.bf16.msra.mxu0 0
    %776 = vmatpush.bf16.msra.mxu0 0
    %777 = vmatpush.bf16.msra.mxu0 0
    %778 = vmatpush.bf16.msra.mxu0 0
    %779 = vmatpush.bf16.msra.mxu0 0
    %780 = vmatpush.bf16.msra.mxu0 %v686
    %781 = vmatpush.bf16.msra.mxu0 %v685
    %782 = vmatmul.bf16.gmra.mxu0 %v772
    %v783 = vpop.f32.mrf.mxu0
    %v784 = vadd.f32 0.0, %v783
    %v785 = vpop.f32.mrf.mxu0
    %786 = vdwg.mxu0
    %v787 = vadd.f32 %v311, %v784
    %v788 = vtanh.pop %v787
    %v789 = vmul.f32 %v788, 0.5
    %v790 = vadd.f32 %v789, 0.5
    %v791 = vmul.f32 %v790, %v760
    %793 = vrot.lane.b32.xlu0 %v788, 64
    %v794 = vpop.permute.xlu0 %793
    %v796 = vmul.f32 %v790, %v794
    %798 = vrot.lane.b32.xlu0 %v796, 32
    %v799 = vpop.permute.xlu0 %798
    %v801 = vadd.f32 %v791, %v799
    %v802 = vtanh.pop %v801
    %804 = vrot.lane.b32.xlu0 %v802, 64
    %v805 = vpop.permute.xlu0 %804
    %v807 = vmul.f32 %v790, %v805
    %v808 = vpack.c.bf16 %v807, %v807
    %810 = vrot.lane.b32.xlu0 %v808, 32
    %v811 = vpop.permute.xlu0 %810
    %v813 = vsel %vm348, %v811, 0
    %815 = vmatpush.bf16.msra.mxu0 0
    %816 = vmatpush.bf16.msra.mxu0 0
    %817 = vmatpush.bf16.msra.mxu0 0
    %818 = vmatpush.bf16.msra.mxu0 0
    %819 = vmatpush.bf16.msra.mxu0 0
    %820 = vmatpush.bf16.msra.mxu0 0
    %821 = vmatpush.bf16.msra.mxu0 %v686
    %822 = vmatpush.bf16.msra.mxu0 %v685
    %823 = vmatmul.bf16.gmra.mxu0 %v813
    %v824 = vpop.f32.mrf.mxu0
    %v825 = vadd.f32 0.0, %v824
    %v826 = vpop.f32.mrf.mxu0
    %827 = vdwg.mxu0
    %v828 = vadd.f32 %v314, %v825
    %v829 = vtanh.pop %v828
    %v830 = vmul.f32 %v829, 0.5
    %v831 = vadd.f32 %v830, 0.5
    %v832 = vmul.f32 %v831, %v801
    %834 = vrot.lane.b32.xlu0 %v829, 64
    %v835 = vpop.permute.xlu0 %834
    %v837 = vmul.f32 %v831, %v835
    %839 = vrot.lane.b32.xlu0 %v837, 32
    %v840 = vpop.permute.xlu0 %839
    %v842 = vadd.f32 %v832, %v840
    %v843 = vtanh.pop %v842
    %845 = vrot.lane.b32.xlu0 %v843, 64
    %v846 = vpop.permute.xlu0 %845
    %v848 = vmul.f32 %v831, %v846
    %v849 = vpack.c.bf16 %v848, %v848
    %851 = vrot.lane.b32.xlu0 %v849, 32
    %v852 = vpop.permute.xlu0 %851
    %v854 = vsel %vm348, %v852, 0
    %856 = vmatpush.bf16.msra.mxu0 0
    %857 = vmatpush.bf16.msra.mxu0 0
    %858 = vmatpush.bf16.msra.mxu0 0
    %859 = vmatpush.bf16.msra.mxu0 0
    %860 = vmatpush.bf16.msra.mxu0 0
    %861 = vmatpush.bf16.msra.mxu0 0
    %862 = vmatpush.bf16.msra.mxu0 %v686
    %863 = vmatpush.bf16.msra.mxu0 %v685
    %864 = vmatmul.bf16.gmra.mxu0 %v854
    %v865 = vpop.f32.mrf.mxu0
    %v866 = vadd.f32 0.0, %v865
    %v867 = vpop.f32.mrf.mxu0
    %868 = vdwg.mxu0
    %v869 = vadd.f32 %v317, %v866
    %v870 = vtanh.pop %v869
    %v871 = vmul.f32 %v870, 0.5
    %v872 = vadd.f32 %v871, 0.5
    %v873 = vmul.f32 %v872, %v842
    %875 = vrot.lane.b32.xlu0 %v870, 64
    %v876 = vpop.permute.xlu0 %875
    %v878 = vmul.f32 %v872, %v876
    %880 = vrot.lane.b32.xlu0 %v878, 32
    %v881 = vpop.permute.xlu0 %880
    %v883 = vadd.f32 %v873, %v881
    %v884 = vtanh.pop %v883
    %886 = vrot.lane.b32.xlu0 %v884, 64
    %v887 = vpop.permute.xlu0 %886
    %v889 = vmul.f32 %v872, %v887
    %v890 = vpack.c.bf16 %v889, %v889
    %892 = vrot.lane.b32.xlu0 %v890, 32
    %v893 = vpop.permute.xlu0 %892
    %v895 = vsel %vm348, %v893, 0
    %897 = vmatpush.bf16.msra.mxu0 0
    %898 = vmatpush.bf16.msra.mxu0 0
    %899 = vmatpush.bf16.msra.mxu0 0
    %900 = vmatpush.bf16.msra.mxu0 0
    %901 = vmatpush.bf16.msra.mxu0 0
    %902 = vmatpush.bf16.msra.mxu0 0
    %903 = vmatpush.bf16.msra.mxu0 %v686
    %904 = vmatpush.bf16.msra.mxu0 %v685
    %905 = vmatmul.bf16.gmra.mxu0 %v895
    %v906 = vpop.f32.mrf.mxu0
    %v907 = vadd.f32 0.0, %v906
    %v908 = vpop.f32.mrf.mxu0
    %909 = vdwg.mxu0
    %v910 = vadd.f32 %v320, %v907
    %v911 = vtanh.pop %v910
    %v912 = vmul.f32 %v911, 0.5
    %v913 = vadd.f32 %v912, 0.5
    %v914 = vmul.f32 %v913, %v883
    %916 = vrot.lane.b32.xlu0 %v911, 64
    %v917 = vpop.permute.xlu0 %916
    %v919 = vmul.f32 %v913, %v917
    %921 = vrot.lane.b32.xlu0 %v919, 32
    %v922 = vpop.permute.xlu0 %921
    %v924 = vadd.f32 %v914, %v922
    %v925 = vtanh.pop %v924
    %927 = vrot.lane.b32.xlu0 %v925, 64
    %v928 = vpop.permute.xlu0 %927
    %v930 = vmul.f32 %v913, %v928
    %v931 = vpack.c.bf16 %v930, %v930
    %933 = vrot.lane.b32.xlu0 %v931, 32
    %v934 = vpop.permute.xlu0 %933
    %v936 = vsel %vm348, %v934, 0
    %938 = vmatpush.bf16.msra.mxu0 0
    %939 = vmatpush.bf16.msra.mxu0 0
    %940 = vmatpush.bf16.msra.mxu0 0
    %941 = vmatpush.bf16.msra.mxu0 0
    %942 = vmatpush.bf16.msra.mxu0 0
    %943 = vmatpush.bf16.msra.mxu0 0
    %944 = vmatpush.bf16.msra.mxu0 %v686
    %945 = vmatpush.bf16.msra.mxu0 %v685
    %946 = vmatmul.bf16.gmra.mxu0 %v936
    %v947 = vpop.f32.mrf.mxu0
    %v948 = vadd.f32 0.0, %v947
    %v949 = vpop.f32.mrf.mxu0
    %950 = vdwg.mxu0
    %v951 = vadd.f32 %v323, %v948
    %v952 = vtanh.pop %v951
    %v953 = vmul.f32 %v952, 0.5
    %v954 = vadd.f32 %v953, 0.5
    %v955 = vmul.f32 %v954, %v924
    %957 = vrot.lane.b32.xlu0 %v952, 64
    %v958 = vpop.permute.xlu0 %957
    %v960 = vmul.f32 %v954, %v958
    %962 = vrot.lane.b32.xlu0 %v960, 32
    %v963 = vpop.permute.xlu0 %962
    %v965 = vadd.f32 %v955, %v963
    %v966 = vtanh.pop %v965
    %968 = vrot.lane.b32.xlu0 %v966, 64
    %v969 = vpop.permute.xlu0 %968
    %v971 = vmul.f32 %v954, %v969
    %v972 = vpack.c.bf16 %v971, %v971
    %974 = vrot.lane.b32.xlu0 %v972, 32
    %v975 = vpop.permute.xlu0 %974
    %v977 = vsel %vm348, %v975, 0
    %979 = vmatpush.bf16.msra.mxu0 0
    %980 = vmatpush.bf16.msra.mxu0 0
    %981 = vmatpush.bf16.msra.mxu0 0
    %982 = vmatpush.bf16.msra.mxu0 0
    %983 = vmatpush.bf16.msra.mxu0 0
    %984 = vmatpush.bf16.msra.mxu0 0
    %985 = vmatpush.bf16.msra.mxu0 %v686
    %986 = vmatpush.bf16.msra.mxu0 %v685
    %987 = vmatmul.bf16.gmra.mxu0 %v977
    %v988 = vpop.f32.mrf.mxu0
    %v989 = vadd.f32 0.0, %v988
    %v990 = vpop.f32.mrf.mxu0
    %991 = vdwg.mxu0
    %v992 = vadd.f32 %v326, %v989
    %v993 = vtanh.pop %v992
    %v994 = vmul.f32 %v993, 0.5
    %v995 = vadd.f32 %v994, 0.5
    %v996 = vmul.f32 %v995, %v965
    %998 = vrot.lane.b32.xlu0 %v993, 64
    %v999 = vpop.permute.xlu0 %998
    %v1001 = vmul.f32 %v995, %v999
    %1003 = vrot.lane.b32.xlu0 %v1001, 32
    %v1004 = vpop.permute.xlu0 %1003
    %v1006 = vadd.f32 %v996, %v1004
    %v1007 = vtanh.pop %v1006
    %1009 = vrot.lane.b32.xlu0 %v1007, 64
    %v1010 = vpop.permute.xlu0 %1009
    %v1012 = vmul.f32 %v995, %v1010
    %v1013 = vld [vmem:[%s8] sm:$0xff]
    %v1014 = vld [vmem:[%s8 + $0x8] sm:$0xff]
    %v1015 = vld [vmem:[%s8 + $0x10] sm:$0xff]
    %v1016 = vld [vmem:[%s8 + $0x18] sm:$0xff]
    %v1017 = vld [vmem:[%s9] sm:$0x1]
    %v1019 = vperm.slane %v1017, 0
    %1029 = vrot.lane.b32.xlu0 %v725, 32
    %v1030 = vpop.permute.xlu0 %1029
    %1031 = vrot.lane.b32.xlu0 %v766, 32
    %v1032 = vpop.permute.xlu0 %1031
    %1033 = vrot.lane.b32.xlu0 %v807, 32
    %v1034 = vpop.permute.xlu0 %1033
    %1035 = vrot.lane.b32.xlu0 %v848, 32
    %v1036 = vpop.permute.xlu0 %1035
    %1037 = vrot.lane.b32.xlu0 %v889, 32
    %v1038 = vpop.permute.xlu0 %1037
    %1039 = vrot.lane.b32.xlu0 %v930, 32
    %v1040 = vpop.permute.xlu0 %1039
    %1041 = vrot.lane.b32.xlu0 %v971, 32
    %v1042 = vpop.permute.xlu0 %1041
    %1043 = vrot.lane.b32.xlu0 %v1012, 32
    %v1044 = vpop.permute.xlu0 %1043
    %v1045 = vsel %vm348, %v1030, 0
    %v1047 = vsel %vm348, %v1032, 0
    %v1049 = vsel %vm348, %v1034, 0
    %v1051 = vsel %vm348, %v1036, 0
    %v1053 = vsel %vm348, %v1038, 0
    %v1055 = vsel %vm348, %v1040, 0
    %v1057 = vsel %vm348, %v1042, 0
    %v1059 = vsel %vm348, %v1044, 0
    %1061 = vmatpush.msra.mxu0 0.0
    %1062 = vmatpush.msra.mxu0 0.0
    %1063 = vmatpush.msra.mxu0 0.0
    %1064 = vmatpush.msra.mxu0 0.0
    %1065 = vmatpush.msra.mxu0 0.0
    %1066 = vmatpush.msra.mxu0 0.0
    %1067 = vmatpush.msra.mxu0 0.0
    %1068 = vmatpush.msra.mxu0 0.0
    %1069 = vmatpush.msra.mxu0 0.0
    %1070 = vmatpush.msra.mxu0 0.0
    %1071 = vmatpush.msra.mxu0 0.0
    %1072 = vmatpush.msra.mxu0 0.0
    %1073 = vmatpush.msra.mxu0 %v1016
    %1074 = vmatpush.msra.mxu0 %v1015
    %1075 = vmatpush.msra.mxu0 %v1014
    %1076 = vmatpush.msra.mxu0 %v1013
    %1077 = vmatmul.f32.gmra.mxu0 %v1045
    %v1078 = vpop.f32.mrf.mxu0
    %v1079 = vadd.f32 %v1019, %v1078
    %1080 = vmatmul.f32.gmra.mxu0 %v1047
    %v1081 = vpop.f32.mrf.mxu0
    %v1082 = vadd.f32 %v1019, %v1081
    %1083 = vmatmul.f32.gmra.mxu0 %v1049
    %v1084 = vpop.f32.mrf.mxu0
    %v1085 = vadd.f32 %v1019, %v1084
    %1086 = vmatmul.f32.gmra.mxu0 %v1051
    %v1087 = vpop.f32.mrf.mxu0
    %v1088 = vadd.f32 %v1019, %v1087
    %1089 = vmatmul.f32.gmra.mxu0 %v1053
    %v1090 = vpop.f32.mrf.mxu0
    %v1091 = vadd.f32 %v1019, %v1090
    %1092 = vmatmul.f32.gmra.mxu0 %v1055
    %v1093 = vpop.f32.mrf.mxu0
    %v1094 = vadd.f32 %v1019, %v1093
    %1095 = vmatmul.f32.gmra.mxu0 %v1057
    %v1096 = vpop.f32.mrf.mxu0
    %v1097 = vadd.f32 %v1019, %v1096
    %1098 = vmatmul.f32.gmra.mxu0 %v1059
    %v1099 = vpop.f32.mrf.mxu0
    %v1100 = vadd.f32 %v1019, %v1099
    %1101 = vdwg.mxu0
    %v1102 = vtanh.pop %v1079
    %v1103 = vtanh.pop %v1082
    %v1104 = vtanh.pop %v1085
    %v1105 = vtanh.pop %v1088
    %v1106 = vtanh.pop %v1091
    %v1107 = vtanh.pop %v1094
    %v1108 = vtanh.pop %v1097
    %v1109 = vtanh.pop %v1100
    %v1110 = vld [vmem:[%s10] sm:$0xff]
    %v1111 = vld [vmem:[%s10 + $0x8] sm:$0xff]
    %v1112 = vld [vmem:[%s10 + $0x10] sm:$0xff]
    %v1113 = vld [vmem:[%s10 + $0x18] sm:$0xff]
    %v1114 = vld [vmem:[%s11] sm:$0x1]
    %v1116 = vperm.slane %v1114, 0
    %v1119 = vsel %vm348, %v1102, 0
    %v1122 = vsel %vm348, %v1103, 0
    %v1125 = vsel %vm348, %v1104, 0
    %v1128 = vsel %vm348, %v1105, 0
    %v1131 = vsel %vm348, %v1106, 0
    %v1134 = vsel %vm348, %v1107, 0
    %v1137 = vsel %vm348, %v1108, 0
    %v1140 = vsel %vm348, %v1109, 0
    %1142 = vmatpush.msra.mxu0 0.0
    %1143 = vmatpush.msra.mxu0 0.0
    %1144 = vmatpush.msra.mxu0 0.0
    %1145 = vmatpush.msra.mxu0 0.0
    %1146 = vmatpush.msra.mxu0 0.0
    %1147 = vmatpush.msra.mxu0 0.0
    %1148 = vmatpush.msra.mxu0 0.0
    %1149 = vmatpush.msra.mxu0 0.0
    %1150 = vmatpush.msra.mxu0 0.0
    %1151 = vmatpush.msra.mxu0 0.0
    %1152 = vmatpush.msra.mxu0 0.0
    %1153 = vmatpush.msra.mxu0 0.0
    %1154 = vmatpush.msra.mxu0 %v1113
    %1155 = vmatpush.msra.mxu0 %v1112
    %1156 = vmatpush.msra.mxu0 %v1111
    %1157 = vmatpush.msra.mxu0 %v1110
    %1158 = vmatmul.f32.gmra.mxu0 %v1119
    %v1159 = vpop.f32.mrf.mxu0
    %v1160 = vadd.f32 %v1116, %v1159
    %1161 = vmatmul.f32.gmra.mxu0 %v1122
    %v1162 = vpop.f32.mrf.mxu0
    %v1163 = vadd.f32 %v1116, %v1162
    %1164 = vmatmul.f32.gmra.mxu0 %v1125
    %v1165 = vpop.f32.mrf.mxu0
    %v1166 = vadd.f32 %v1116, %v1165
    %1167 = vmatmul.f32.gmra.mxu0 %v1128
    %v1168 = vpop.f32.mrf.mxu0
    %v1169 = vadd.f32 %v1116, %v1168
    %1170 = vmatmul.f32.gmra.mxu0 %v1131
    %v1171 = vpop.f32.mrf.mxu0
    %v1172 = vadd.f32 %v1116, %v1171
    %1173 = vmatmul.f32.gmra.mxu0 %v1134
    %v1174 = vpop.f32.mrf.mxu0
    %v1175 = vadd.f32 %v1116, %v1174
    %1176 = vmatmul.f32.gmra.mxu0 %v1137
    %v1177 = vpop.f32.mrf.mxu0
    %v1178 = vadd.f32 %v1116, %v1177
    %1179 = vmatmul.f32.gmra.mxu0 %v1140
    %v1180 = vpop.f32.mrf.mxu0
    %v1181 = vadd.f32 %v1116, %v1180
    %1182 = vdwg.mxu0
    %1183 = vmax.xlane.f32.xlu0 %v1160
    %v1184 = vpop.xlane.xlu0 %1183
    %1185 = vmax.xlane.f32.xlu0 %v1163
    %v1186 = vpop.xlane.xlu0 %1185
    %1187 = vmax.xlane.f32.xlu0 %v1166
    %v1188 = vpop.xlane.xlu0 %1187
    %1189 = vmax.xlane.f32.xlu0 %v1169
    %v1190 = vpop.xlane.xlu0 %1189
    %1191 = vmax.xlane.f32.xlu0 %v1172
    %v1192 = vpop.xlane.xlu0 %1191
    %1193 = vmax.xlane.f32.xlu0 %v1175
    %v1194 = vpop.xlane.xlu0 %1193
    %1195 = vmax.xlane.f32.xlu0 %v1178
    %v1196 = vpop.xlane.xlu0 %1195
    %1197 = vmax.xlane.f32.xlu0 %v1181
    %v1198 = vpop.xlane.xlu0 %1197
    %v1199 = vsub.f32 %v1160, %v1184
    %v1200 = vsub.f32 %v1163, %v1186
    %v1201 = vsub.f32 %v1166, %v1188
    %v1202 = vsub.f32 %v1169, %v1190
    %v1203 = vsub.f32 %v1172, %v1192
    %v1204 = vsub.f32 %v1175, %v1194
    %v1205 = vsub.f32 %v1178, %v1196
    %v1206 = vsub.f32 %v1181, %v1198
    %v1207 = vmul.f32 %v1199, 1.442695
    %v1208 = vpow.pop %v1207
    %v1209 = vmul.f32 %v1200, 1.442695
    %v1210 = vpow.pop %v1209
    %v1211 = vmul.f32 %v1201, 1.442695
    %v1212 = vpow.pop %v1211
    %v1213 = vmul.f32 %v1202, 1.442695
    %v1214 = vpow.pop %v1213
    %v1215 = vmul.f32 %v1203, 1.442695
    %v1216 = vpow.pop %v1215
    %v1217 = vmul.f32 %v1204, 1.442695
    %v1218 = vpow.pop %v1217
    %v1219 = vmul.f32 %v1205, 1.442695
    %v1220 = vpow.pop %v1219
    %v1221 = vmul.f32 %v1206, 1.442695
    %v1222 = vpow.pop %v1221
    %1223 = vadd.xlane.f32.xlu0 %v1208
    %v1224 = vpop.xlane.xlu0 %1223
    %1225 = vadd.xlane.f32.xlu0 %v1210
    %v1226 = vpop.xlane.xlu0 %1225
    %1227 = vadd.xlane.f32.xlu0 %v1212
    %v1228 = vpop.xlane.xlu0 %1227
    %1229 = vadd.xlane.f32.xlu0 %v1214
    %v1230 = vpop.xlane.xlu0 %1229
    %1231 = vadd.xlane.f32.xlu0 %v1216
    %v1232 = vpop.xlane.xlu0 %1231
    %1233 = vadd.xlane.f32.xlu0 %v1218
    %v1234 = vpop.xlane.xlu0 %1233
    %1235 = vadd.xlane.f32.xlu0 %v1220
    %v1236 = vpop.xlane.xlu0 %1235
    %1237 = vadd.xlane.f32.xlu0 %v1222
    %v1238 = vpop.xlane.xlu0 %1237
    %v1239 = vlog2.pop %v1224
    %v1240 = vmul.f32 %v1239, 0.6931472
    %v1241 = vlog2.pop %v1226
    %v1242 = vmul.f32 %v1241, 0.6931472
    %v1243 = vlog2.pop %v1228
    %v1244 = vmul.f32 %v1243, 0.6931472
    %v1245 = vlog2.pop %v1230
    %v1246 = vmul.f32 %v1245, 0.6931472
    %v1247 = vlog2.pop %v1232
    %v1248 = vmul.f32 %v1247, 0.6931472
    %v1249 = vlog2.pop %v1234
    %v1250 = vmul.f32 %v1249, 0.6931472
    %v1251 = vlog2.pop %v1236
    %v1252 = vmul.f32 %v1251, 0.6931472
    %v1253 = vlog2.pop %v1238
    %v1254 = vmul.f32 %v1253, 0.6931472
    %v1255 = vadd.f32 %v1184, %v1240
    %v1256 = vadd.f32 %v1186, %v1242
    %v1257 = vadd.f32 %v1188, %v1244
    %v1258 = vadd.f32 %v1190, %v1246
    %v1259 = vadd.f32 %v1192, %v1248
    %v1260 = vadd.f32 %v1194, %v1250
    %v1261 = vadd.f32 %v1196, %v1252
    %v1262 = vadd.f32 %v1198, %v1254
    %v1263 = vsub.f32 %v1160, %v1255
    %v1264 = vsub.f32 %v1163, %v1256
    %v1265 = vsub.f32 %v1166, %v1257
    %v1266 = vsub.f32 %v1169, %v1258
    %v1267 = vsub.f32 %v1172, %v1259
    %v1268 = vsub.f32 %v1175, %v1260
    %v1269 = vsub.f32 %v1178, %v1261
    %v1270 = vsub.f32 %v1181, %v1262
    %1271 = vst [vmem:[%s12] sm:$0xff] %v1263
    %1272 = vst [vmem:[%s12 + $0x8] sm:$0xff] %v1264
    %1273 = vst [vmem:[%s12 + $0x10] sm:$0xff] %v1265
    %1274 = vst [vmem:[%s12 + $0x18] sm:$0xff] %v1266
    %1275 = vst [vmem:[%s12 + $0x20] sm:$0xff] %v1267
    %1276 = vst [vmem:[%s12 + $0x28] sm:$0xff] %v1268
    %1277 = vst [vmem:[%s12 + $0x30] sm:$0xff] %v1269
    %1278 = vst [vmem:[%s12 + $0x38] sm:$0xff] %v1270
    %v1279 = vmul.f32 %v1263, %v199
    %v1280 = vmul.f32 %v1264, %v200
    %v1281 = vmul.f32 %v1265, %v201
    %v1282 = vmul.f32 %v1266, %v202
    %v1283 = vmul.f32 %v1267, %v203
    %v1284 = vmul.f32 %v1268, %v204
    %v1285 = vmul.f32 %v1269, %v205
    %1286 = vadd.xlane.f32.xlu0 %v1279
    %v1287 = vpop.xlane.xlu0 %1286
    %1288 = vadd.xlane.f32.xlu0 %v1280
    %v1289 = vpop.xlane.xlu0 %1288
    %1290 = vadd.xlane.f32.xlu0 %v1281
    %v1291 = vpop.xlane.xlu0 %1290
    %1292 = vadd.xlane.f32.xlu0 %v1282
    %v1293 = vpop.xlane.xlu0 %1292
    %1294 = vadd.xlane.f32.xlu0 %v1283
    %v1295 = vpop.xlane.xlu0 %1294
    %1296 = vadd.xlane.f32.xlu0 %v1284
    %v1297 = vpop.xlane.xlu0 %1296
    %1298 = vadd.xlane.f32.xlu0 %v1285
    %v1299 = vpop.xlane.xlu0 %1298
    %vm1300 = vcmp.ne.s32.totalorder %v101, 1
    %vm1301 = vcmp.ne.s32.totalorder %v102, 1
    %vm1302 = vcmp.ne.s32.totalorder %v103, 1
    %vm1303 = vcmp.ne.s32.totalorder %v104, 1
    %vm1304 = vcmp.ne.s32.totalorder %v105, 1
    %vm1305 = vcmp.ne.s32.totalorder %v106, 1
    %vm1306 = vcmp.ne.s32.totalorder %v107, 1
    %v1307 = vsel %vm1300, 1, 0
    %v1308 = vsel %vm1301, 1, 0
    %v1309 = vsel %vm1302, 1, 0
    %v1310 = vsel %vm1303, 1, 0
    %v1311 = vsel %vm1304, 1, 0
    %v1312 = vsel %vm1305, 1, 0
    %v1313 = vsel %vm1306, 1, 0
    %v1314 = vcvt.s32.f32 %v1307
    %v1315 = vcvt.s32.f32 %v1308
    %v1316 = vcvt.s32.f32 %v1309
    %v1317 = vcvt.s32.f32 %v1310
    %v1318 = vcvt.s32.f32 %v1311
    %v1319 = vcvt.s32.f32 %v1312
    %v1320 = vcvt.s32.f32 %v1313
    %v1321 = vmul.f32 %v1287, %v1314
    %v1322 = vmul.f32 %v1289, %v1315
    %v1323 = vmul.f32 %v1291, %v1316
    %v1324 = vmul.f32 %v1293, %v1317
    %v1325 = vmul.f32 %v1295, %v1318
    %v1326 = vmul.f32 %v1297, %v1319
    %v1327 = vmul.f32 %v1299, %v1320
    %vm1328 = vcmask 7168
    %v1329 = vsel %vm1328, %v1321, 0.0
    %v1330 = vsel %vm1328, %v1322, 0.0
    %v1331 = vadd.f32 %v1329, %v1330
    %v1332 = vsel %vm1328, %v1323, 0.0
    %v1333 = vadd.f32 %v1331, %v1332
    %v1334 = vsel %vm1328, %v1324, 0.0
    %v1335 = vadd.f32 %v1333, %v1334
    %v1336 = vsel %vm1328, %v1325, 0.0
    %v1337 = vadd.f32 %v1335, %v1336
    %v1338 = vsel %vm1328, %v1326, 0.0
    %v1339 = vadd.f32 %v1337, %v1338
    %v1340 = vsel %vm1328, %v1327, 0.0
    %v1341 = vadd.f32 %v1339, %v1340
    %v1342 = vrot.slane %v1341, 4
    %v1343 = vadd.f32 %v1341, %v1342
    %v1344 = vrot.slane %v1343, 2
    %v1345 = vadd.f32 %v1343, %v1344
    %v1346 = vrot.slane %v1345, 1
    %v1347 = vadd.f32 %v1345, %v1346
    %v1348 = vsel %vm1328, %v1314, 0.0
    %v1349 = vsel %vm1328, %v1315, 0.0
    %v1350 = vadd.f32 %v1348, %v1349
    %v1351 = vsel %vm1328, %v1316, 0.0
    %v1352 = vadd.f32 %v1350, %v1351
    %v1353 = vsel %vm1328, %v1317, 0.0
    %v1354 = vadd.f32 %v1352, %v1353
    %v1355 = vsel %vm1328, %v1318, 0.0
    %v1356 = vadd.f32 %v1354, %v1355
    %v1357 = vsel %vm1328, %v1319, 0.0
    %v1358 = vadd.f32 %v1356, %v1357
    %v1359 = vsel %vm1328, %v1320, 0.0
    %v1360 = vadd.f32 %v1358, %v1359
    %v1361 = vrot.slane %v1360, 4
    %v1362 = vadd.f32 %v1360, %v1361
    %v1363 = vrot.slane %v1362, 2
    %v1364 = vadd.f32 %v1362, %v1363
    %v1365 = vrot.slane %v1364, 1
    %v1366 = vadd.f32 %v1364, %v1365
    %v1367 = vrcp.pop %v1366
    %v1368 = vmul.f32 %v1366, %v1367
    %v1369 = vsub.f32 1.0, %v1368
    %v1370 = vmul.f32 %v1367, %v1369
    %v1371 = vadd.f32 %v1367, %v1370
    %vm1372 = vweird.f32 %v1366
    %vm1373 = vweird.f32 %v1367
    %vm1374 = vmor %vm1372, %vm1373
    %v1375 = vsel %vm1374, %v1367, %v1371
    %v1376 = vand.u32 2147483647, %v1366
    %vm1377 = vcmp.eq.f32.partialorder %v1376, 8.507059e+37
    %v1378 = vand.u32 %v1366, 2147483648
    %v1379 = vor.u32 1.1754944e-38, %v1378
    %v1380 = vsel %vm1377, %v1379, %v1375
    %v1381 = vmul.f32 %v1347, %v1380
    %v1382 = vsub.f32 0.0, %v1381
    %vm1383 = vcmask 0
    %1384 = vst.msk [vmem:[#allocation8] sm:$0x1] %vm1383, %v1382
    // Predicated region
    $region62: #{s2s_forward.1} parent=1 // pred_check
      _
    $region63: #{s2s_forward.1} parent=1 // pred_check_branch
      %1386 = sbr.rel (0) target = $region65
    $region64: #{s2s_forward.1} parent=1 // pred_region
      _
    $region65: #{s2s_forward.1} parent=1 // pred_fallthru
      _
    // Predicated region
    $region66: #{s2s_forward.1} parent=1 // pred_check
      _
    $region67: #{s2s_forward.1} parent=1 // pred_check_branch
      %1388 = sbr.rel (0) target = $region69
    $region68: #{s2s_forward.1} parent=1 // pred_region
      %1390 = vsyncadd [#allocation4], 0
      %s1392 = sshll.u32 [#allocation8], 4
      %s1393 = int_to_ptr.vmem [resolvable:$true] %s1392
      %s1394 = sshll.u32 %s13, 4
      %s1395 = int_to_ptr.hbm [resolvable:$true] %s1394
      %1397 = dma.vmem_to_hbm [thread:$0]  %s1393, 16, %s1395, [#allocation4]
    $region69: #{s2s_forward.1} parent=1 // pred_fallthru
      _
    // Predicated region
    $region70: #{s2s_forward.1} parent=1 // pred_check
      _
    $region71: #{s2s_forward.1} parent=1 // pred_check_branch
      %1399 = sbr.rel (0) target = $region73
    $region72: #{s2s_forward.1} parent=1 // pred_region
      _
    $region73: #{s2s_forward.1} parent=1 // pred_fallthru
      _
    // Predicated region
    $region74: #{s2s_forward.1} parent=1 // pred_check
      _
    $region75: #{s2s_forward.1} parent=1 // pred_check_branch
      %1401 = sbr.rel (0) target = $region77
    $region76: #{s2s_forward.1} parent=1 // pred_region
      %1403 = dma.done [#allocation4], 16
    $region77: #{s2s_forward.1} parent=1 // pred_fallthru
      _
    %1404 = vsyncpa [#allocation3], 1
    %1405 = vsyncpa [#allocation6], 1
    %1406 = vsyncpa [#allocation4], 1

</llo_original>
